<compile_context>
chip_gen: v6e
topology: v6e:2x2x1
jax: 0.10.0
libtpu: 0.0.40
codegen_flags: <defaults>
</compile_context>

<pallas_src>
import jax
import jax.numpy as jnp
from jax.experimental import pallas as pl
from jax.experimental.pallas import tpu as pltpu

HIDDEN = 256          # GRU hidden size
FEAT_IN = 2048        # GRU input size (C*H*W per frame)
NUM_CLASSES = 11

_VMEM_LIMIT = 64 * 1024 * 1024


# --------------------------------------------------------------------------
# Kernel 1: fused fwd+bwd input projection, K-tiled so the big Wih weight
# tiles double-buffer against MXU compute.
#   x_ref : (M, tk)  block of x2d = reshape(x_tm, (T*B, D)), f32
#   w_ref : (tk, 6H) block of fused [Wih_fwd | Wih_bwd], bf16
#   o_ref : (M, 6H)  f32 accumulator, resident across the K grid axis
# --------------------------------------------------------------------------
def input_proj_kernel(x_ref, w_ref, o_ref):
    k = pl.program_id(0)

    @pl.when(k == 0)
    def _init():
        o_ref[...] = jnp.zeros_like(o_ref)

    o_ref[...] += jnp.dot(x_ref[...].astype(jnp.bfloat16), w_ref[...],
                          preferred_element_type=jnp.float32)


def input_projection(x2d, w_fused, *, tk=512):
    M, D = x2d.shape
    N = w_fused.shape[1]
    if D % tk != 0:
        tk = D
    nk = D // tk
    return pl.pallas_call(
        input_proj_kernel,
        out_shape=jax.ShapeDtypeStruct((M, N), jnp.float32),
        grid_spec=pltpu.PrefetchScalarGridSpec(
            num_scalar_prefetch=0,
            grid=(nk,),
            in_specs=[pl.BlockSpec((M, tk), lambda k: (0, k)),
                      pl.BlockSpec((tk, N), lambda k: (k, 0))],
            out_specs=pl.BlockSpec((M, N), lambda k: (0, 0))),
        compiler_params=pltpu.CompilerParams(
            dimension_semantics=("arbitrary",),
            vmem_limit_bytes=_VMEM_LIMIT),
    )(x2d, w_fused)


# --------------------------------------------------------------------------
# Kernel 2: bidirectional GRU recurrence (input projection already done).
#   gi_ref   : (T, B, 6H) f32   precomputed x@Wih for [fwd | bwd]
#   whh_*    : (H, 3H)    bf16  hidden->gates weights (gate order r, z, n)
#   bih/bhh  : (1, 6H)    f32   biases for [fwd | bwd]
#   out_ref  : (T, B, 2H) f32   hidden state at every step, [fwd | bwd]
# Backward direction is handled by indexing time T-1-t inside the kernel.
# --------------------------------------------------------------------------
def bigru_rec_kernel(gi_ref, whh_f_ref, whh_b_ref, bih_ref, bhh_ref, out_ref):
    T, B, six_h = gi_ref.shape
    H = six_h // 6
    whh_f = whh_f_ref[...]
    whh_b = whh_b_ref[...]
    bih = bih_ref[...]
    bhh = bhh_ref[...]
    bih_f, bih_b = bih[:, :3 * H], bih[:, 3 * H:]
    bhh_f, bhh_b = bhh[:, :3 * H], bhh[:, 3 * H:]

    def step(gi_t, h, whh, bi, bh):
        gi = gi_t + bi                                               # (B, 3H)
        gh = jnp.dot(h.astype(jnp.bfloat16), whh,
                     preferred_element_type=jnp.float32) + bh        # (B, 3H)
        r = jax.nn.sigmoid(gi[:, :H] + gh[:, :H])
        z = jax.nn.sigmoid(gi[:, H:2 * H] + gh[:, H:2 * H])
        n = jnp.tanh(gi[:, 2 * H:] + r * gh[:, 2 * H:])
        return (1.0 - z) * n + z * h

    h_f = jnp.zeros((B, H), jnp.float32)
    h_b = jnp.zeros((B, H), jnp.float32)
    # T is small & static -> unrolled.  For long sequences this would become
    # a lax.fori_loop with gi/out tiled over T via BlockSpec.
    for t in range(T):
        h_f = step(gi_ref[t, :, :3 * H], h_f, whh_f, bih_f, bhh_f)
        out_ref[t, :, :H] = h_f
        tb = T - 1 - t
        h_b = step(gi_ref[tb, :, 3 * H:], h_b, whh_b, bih_b, bhh_b)
        out_ref[tb, :, H:] = h_b


def bigru_layer(x_tm, lp):
    """x_tm: (T, B, D) time-major -> (T, B, 2H) time-major."""
    T, B, D = x_tm.shape
    gi2d = input_projection(x_tm.reshape(T * B, D), lp["wih"])      # (T*B, 6H)
    gi_tm = gi2d.reshape(T, B, 6 * HIDDEN)
    return pl.pallas_call(
        bigru_rec_kernel,
        out_shape=jax.ShapeDtypeStruct((T, B, 2 * HIDDEN), jnp.float32),
        in_specs=[pl.BlockSpec(memory_space=pltpu.MemorySpace.VMEM)] * 5,
        out_specs=pl.BlockSpec(memory_space=pltpu.MemorySpace.VMEM),
        compiler_params=pltpu.CompilerParams(vmem_limit_bytes=_VMEM_LIMIT),
    )(gi_tm, lp["whh_f"], lp["whh_b"], lp["bih"], lp["bhh"])


# --------------------------------------------------------------------------
# Kernel 3: attention pooling + max pooling + MLP head + log-softmax.
#   feat_ref : (T, B, 512) time-major GRU output
#   out_ref  : (B, 11) log-probs
# --------------------------------------------------------------------------
def head_kernel(feat_ref, wa1_ref, ba1_ref, wa2_ref, ba2_ref,
                w1_ref, b1_ref, w2_ref, b2_ref, wo_ref, bo_ref, out_ref):
    T, B, F = feat_ref.shape
    feat = feat_ref[...]                                             # (T, B, F)
    feat2d = feat.reshape(T * B, F)

    # attention MLP: Linear(512->128) -> tanh -> Linear(128->1) -> ReLU
    ah = jnp.tanh(
        jnp.dot(feat2d.astype(jnp.bfloat16), wa1_ref[...],
                preferred_element_type=jnp.float32) + ba1_ref[...])  # (T*B,128)
    # second linear has out_features=1 -> lane reduction instead of a
    # degenerate N=1 matmul (wa2 stored as a (1, 128) row vector).
    al = jnp.sum(ah * wa2_ref[...], axis=-1, keepdims=True) + ba2_ref[...]
    al = jnp.maximum(al, 0.0).reshape(T, B, 1)

    # softmax over the time axis (axis 0 in time-major layout)
    m = jnp.max(al, axis=0, keepdims=True)
    e = jnp.exp(al - m)
    denom = jnp.sum(e, axis=0, keepdims=True)
    att = e * pl.reciprocal(denom, approx=True)                      # (T, B, 1)

    feat_att = jnp.sum(feat * att, axis=0)                           # (B, F)
    feat_max = jnp.max(feat, axis=0)                                 # (B, F)
    cat = jnp.concatenate([feat_att, feat_max], axis=-1)             # (B, 2F)

    # classifier MLP (Dropouts are identity in eval mode)
    h1 = jnp.maximum(
        jnp.dot(cat.astype(jnp.bfloat16), w1_ref[...],
                preferred_element_type=jnp.float32) + b1_ref[...], 0.0)
    h2 = jnp.maximum(
        jnp.dot(h1.astype(jnp.bfloat16), w2_ref[...],
                preferred_element_type=jnp.float32) + b2_ref[...], 0.0)
    logits = (jnp.dot(h2.astype(jnp.bfloat16), wo_ref[...],
                      preferred_element_type=jnp.float32) + bo_ref[...])

    # log-softmax over last dim
    lm = jnp.max(logits, axis=-1, keepdims=True)
    lse = jnp.log(jnp.sum(jnp.exp(logits - lm), axis=-1, keepdims=True)) + lm
    out_ref[...] = logits - lse


def run_head(feat_tm, p):
    T, B, F = feat_tm.shape
    args = (feat_tm, p["wa1"], p["ba1"], p["wa2"], p["ba2"],
            p["w1"], p["b1"], p["w2"], p["b2"], p["wo"], p["bo"])
    return pl.pallas_call(
        head_kernel,
        out_shape=jax.ShapeDtypeStruct((B, NUM_CLASSES), jnp.float32),
        in_specs=[pl.BlockSpec(memory_space=pltpu.MemorySpace.VMEM)] * len(args),
        out_specs=pl.BlockSpec(memory_space=pltpu.MemorySpace.VMEM),
        compiler_params=pltpu.CompilerParams(vmem_limit_bytes=_VMEM_LIMIT),
    )(*args)


# --------------------------------------------------------------------------
# Glue: split concatenated frames into padded per-video sequences, directly
# in time-major layout (host side; matches torch zero-padding semantics --
# padded steps are NOT masked, same as the reference module).
# --------------------------------------------------------------------------
def build_frame_feature(x, lengths):
    # x: (N, C, H, W) float32; lengths: python list with sum(lengths) == N
    max_len = max(lengths)
    feats = []
    start = 0
    for l in lengths:
        video = x[start:start + l].reshape(l, -1)                    # (l, C*H*W)
        if l < max_len:
            pad = jnp.zeros((max_len - l, video.shape[1]), video.dtype)
            video = jnp.concatenate([video, pad], axis=0)
        feats.append(video)
        start += l
    return jnp.stack(feats, axis=1)                                  # (T, B, 2048)


def att_classifier_forward(x, lengths, params):
    assert sum(lengths) == x.shape[0]
    feat_tm = build_frame_feature(x, lengths)                        # (T, B, 2048)
    out0 = bigru_layer(feat_tm, params["gru0"])                      # (T, B, 512)
    out1 = bigru_layer(out0, params["gru1"])                         # (T, B, 512)
    return run_head(out1, params)                                    # (B, 11)


# --------------------------------------------------------------------------
# Deterministic parameter init (normal(0, 0.01) weights, zero biases),
# shapes taken from the PyTorch module's __init__.  Matmul weights stored in
# bf16 (MXU-native); gate / elementwise math stays f32.
# --------------------------------------------------------------------------
def init_params(key):
    std = 0.01
    keys = iter(jax.random.split(key, 64))

    def normal(shape):
        return std * jax.random.normal(next(keys), shape, jnp.float32)

    def gru_layer(din):
        wih_f = normal((din, 3 * HIDDEN))
        wih_b = normal((din, 3 * HIDDEN))
        return {
            "wih": jnp.concatenate([wih_f, wih_b], axis=1).astype(jnp.bfloat16),
            "whh_f": normal((HIDDEN, 3 * HIDDEN)).astype(jnp.bfloat16),
            "whh_b": normal((HIDDEN, 3 * HIDDEN)).astype(jnp.bfloat16),
            "bih": jnp.zeros((1, 6 * HIDDEN), jnp.float32),
            "bhh": jnp.zeros((1, 6 * HIDDEN), jnp.float32),
        }

    params = {
        "gru0": gru_layer(FEAT_IN),
        "gru1": gru_layer(2 * HIDDEN),
        # attention: Linear(512,128) -> tanh -> Linear(128,1) -> ReLU
        "wa1": normal((2 * HIDDEN, 128)).astype(jnp.bfloat16),
        "ba1": jnp.zeros((1, 128), jnp.float32),
        "wa2": normal((1, 128)),                      # row vector, f32 (VPU)
        "ba2": jnp.zeros((1, 1), jnp.float32),
        # classifier: Linear(1024,256) -> ReLU -> Linear(256,128) -> ReLU
        "w1": normal((256 * 2 * 2, 256)).astype(jnp.bfloat16),
        "b1": jnp.zeros((1, 256), jnp.float32),
        "w2": normal((256, 128)).astype(jnp.bfloat16),
        "b2": jnp.zeros((1, 128), jnp.float32),
        # output layer: Linear(128, 11)
        "wo": normal((128, NUM_CLASSES)).astype(jnp.bfloat16),
        "bo": jnp.zeros((1, NUM_CLASSES), jnp.float32),
    }
    return params


if __name__ == "__main__":
    key = jax.random.PRNGKey(0)
    k_param, k_x = jax.random.split(key)

    # Two videos with 8 and 5 frames; each frame is (C=8, H=16, W=16) -> 2048.
    lengths = [8, 5]
    x = jax.random.normal(k_x, (sum(lengths), 8, 16, 16), jnp.float32)

    params = init_params(k_param)
    out = att_classifier_forward(x, lengths, params)                 # (2, 11)
    jax.block_until_ready(out)
    assert out.shape == (len(lengths), NUM_CLASSES)
    print("KERNEL_OK")
</pallas_src>

<mosaic_0001>
module attributes {stable_mosaic.version = 11 : i64} {
  func.func @input_proj_kernel(%arg0: i32, %arg1: memref<16x512xf32, #tpu.memory_space<vmem>>, %arg2: memref<512x1536xbf16, #tpu.memory_space<vmem>>, %arg3: memref<16x1536xf32, #tpu.memory_space<vmem>>) attributes {dimension_semantics = [#tpu.dimension_semantics<arbitrary>], iteration_bounds = array<i64: 4>, scalar_prefetch = 0 : i64, scratch_operands = 0 : i64, tpu.core_type = #tpu.core_type<tc>, window_params = [{transform_indices = @transform_0, window_bounds = array<i64: 16, 512>}, {transform_indices = @transform_1, window_bounds = array<i64: 512, 1536>}, {pipeline_mode = #tpu.pipeline_mode<synchronous>, transform_indices = @transform_2, window_bounds = array<i64: 16, 1536>}]} {
    %c0_i32 = arith.constant 0 : i32
    %0 = arith.cmpi eq, %arg0, %c0_i32 : i32
    %1 = arith.extui %0 : i1 to i32
    %c0_i32_0 = arith.constant 0 : i32
    %2 = arith.cmpi ne, %1, %c0_i32_0 : i32
    scf.if %2 {
      %cst_8 = arith.constant 0.000000e+00 : f32
      %10 = vector.broadcast %cst_8 : f32 to vector<16x1536xf32>
      %c0_9 = arith.constant 0 : index
      %c0_10 = arith.constant 0 : index
      %11 = vector.load %arg3[%c0_9, %c0_10] : memref<16x1536xf32, #tpu.memory_space<vmem>>, vector<16x1536xf32>
      tpu.vector_store %arg3[%c0_9, %c0_10], %10 {strides = array<i32>} : memref<16x1536xf32, #tpu.memory_space<vmem>>, vector<16x1536xf32>,
    } else {
    }
    %c0 = arith.constant 0 : index
    %c0_1 = arith.constant 0 : index
    %3 = vector.load %arg3[%c0, %c0_1] : memref<16x1536xf32, #tpu.memory_space<vmem>>, vector<16x1536xf32>
    %c0_2 = arith.constant 0 : index
    %c0_3 = arith.constant 0 : index
    %4 = vector.load %arg1[%c0_2, %c0_3] : memref<16x512xf32, #tpu.memory_space<vmem>>, vector<16x512xf32>
    %5 = arith.truncf %4 : vector<16x512xf32> to vector<16x512xbf16>
    %c0_4 = arith.constant 0 : index
    %c0_5 = arith.constant 0 : index
    %6 = vector.load %arg2[%c0_4, %c0_5] : memref<512x1536xbf16, #tpu.memory_space<vmem>>, vector<512x1536xbf16>
    %cst = arith.constant dense<0.000000e+00> : vector<16x1536xf32>
    %7 = tpu.matmul %5, %6, %cst {dimension_numbers = #tpu.dot_dimension_numbers<[1], [0], [0], [1], [0, 0, 1, 1], [], []>} : vector<16x512xbf16>, vector<512x1536xbf16>, vector<16x1536xf32> -> vector<16x1536xf32>
    %8 = arith.addf %3, %7 : vector<16x1536xf32>
    %c0_6 = arith.constant 0 : index
    %c0_7 = arith.constant 0 : index
    %9 = vector.load %arg3[%c0_6, %c0_7] : memref<16x1536xf32, #tpu.memory_space<vmem>>, vector<16x1536xf32>
    tpu.vector_store %arg3[%c0_6, %c0_7], %8 {strides = array<i32>} : memref<16x1536xf32, #tpu.memory_space<vmem>>, vector<16x1536xf32>,
    return
  }
  func.func @transform_0(%arg0: i32) -> (i32, i32) {
    %c0_i32 = arith.constant 0 : i32
    %c0_i32_0 = arith.constant 0 : i32
    return %c0_i32, %arg0 : i32, i32
  }
  func.func @transform_1(%arg0: i32) -> (i32, i32) {
    %c0_i32 = arith.constant 0 : i32
    %c0_i32_0 = arith.constant 0 : i32
    return %arg0, %c0_i32 : i32, i32
  }
  func.func @transform_2(%arg0: i32) -> (i32, i32) {
    %c0_i32 = arith.constant 0 : i32
    %c0_i32_0 = arith.constant 0 : i32
    %c0_i32_1 = arith.constant 0 : i32
    return %c0_i32, %c0_i32_0 : i32, i32
  }
}

</mosaic_0001>

<llo_original>
// kernel: tpu_custom_call.1
$region0: #{tpu_custom_call.1}
  #allocation0 [shape = 'u32[]', space=smem, size = 0x4, offset = 0x4, fixed_abs, tag = 'smem constant byte address 0x4 - core index']
  #allocation1 [shape = 'u32[144,128]{1,0:T(1,128)}', space=vmem, size = 0x12000, scoped, tag = 'internal scratch']
  %s0 = inlined_call_operand.hbm [shape: f32[16,2048], index: 0, kind: input, shape index: {}]
  %s1 = inlined_call_operand.hbm [shape: bf16[2048,1536], index: 1, kind: input, shape index: {}]
  %s2 = inlined_call_operand.hbm [shape: f32[16,1536], index: 2, kind: output, shape index: {}]
  %s3 = sld [smem:[#allocation0]]
  $region53: #{tpu_custom_call.1} parent=0
    _
  %s5 = ssub.s32 1, %s3
  %s6 = scalar_select 0, %s5, %s3
  $region1: #{tpu_custom_call.1} parent=0
    #allocation2 [shape = 'u8[65536]{0}', space=vmem, size = 0x10000, scoped, tag = 'input window, operand 0']
    #allocation3 [shape = 's32[2]{0}', space=sflag, size = 0x8, scoped, tag = 'scoped memory for tpu_custom_call.1']
    #allocation4 [shape = 's32[2]{0}', space=sflag, size = 0x8, scoped, tag = 'scoped memory for tpu_custom_call.1']
    #allocation5 [shape = 'u8[3145728]{0}', space=vmem, size = 0x300000, scoped, tag = 'input window, operand 1']
    #allocation6 [shape = 's32[2]{0}', space=sflag, size = 0x8, scoped, tag = 'scoped memory for tpu_custom_call.1']
    #allocation7 [shape = 'u8[98304]{0}', space=vmem, size = 0x18000, scoped, tag = 'output window, operand 0, single buffered']
    %7 = vsyncpa [#allocation3], 0
    %s8 = scalar_lea.sflag [#allocation3], 1
    %9 = vsyncpa %s8, 0
    %10 = vsyncpa [#allocation6], 0
    %s11 = scalar_lea.sflag [#allocation6], 1
    %12 = vsyncpa %s11, 0
    %13 = vsyncpa [#allocation4], 0
    loop: start=0, step=1, limit=6
    $region2: #{tpu_custom_call.1} parent=1 // loop_pre_header
      _
    $region3: #{tpu_custom_call.1} parent=1 // loop_header
      %s15 = sphi 0, %s19
      %p16 = scmp.ge.s32.totalorder %s15, 6
      %s25 = sphi 0, %s27
      %s28 = sphi 0, %s25
      %s29 = sphi 0, %s28
      %s45 = sphi 0, %s29
      %s51 = sphi 0, %s53
      %s54 = sphi 0, %s51
      %s55 = sphi 0, %s54
      %s71 = sphi 0, %s55
      %s75 = sphi 0, %s75
      %s77 = sphi 0, %s75
      %s78 = sphi 0, %s77
      %s92 = sphi 0, %s78
    $region4: #{tpu_custom_call.1} parent=1 // loop_header_branch
      %18 = sbr.rel (%p16) target = $region8
    $region5: #{tpu_custom_call.1} parent=1 // loop_body
      %s20 = ssub.s32 %s15, 1
      %s21 = ssub.s32 %s15, 2
      %s22 = sadd.s32 %s15, 1
      %s23 = ssub.s32 %s15, %s22
      %p24 = scmp.eq.s32.totalorder %s23, 0
      %s26 = sadd.s32 %s25, 1
      %s27 = scalar_select %p24, %s25, %s26
      %p30 = pneg %p24
      %p31 = scmp.eq.s32.totalorder %s15, 3
      %p32 = por %p30, %p31
      %p33 = scmp.ne.s32.totalorder %s25, %s28
      %p34 = scmp.eq.s32.totalorder %s15, 0
      %p35 = por %p33, %p34
      %p36 = scmp.ne.s32.totalorder %s25, %s28
      %p37 = scmp.eq.s32.totalorder %s20, 3
      %p38 = por %p36, %p37
      %p39 = scmp.ne.s32.totalorder %s28, %s29
      %p40 = scmp.eq.s32.totalorder %s20, 0
      %p41 = por %p39, %p40
      %p42 = scmp.ne.s32.totalorder %s28, %s29
      %p43 = scmp.eq.s32.totalorder %s21, 3
      %p44 = por %p42, %p43
      %p46 = scmp.ne.s32.totalorder %s29, %s45
      %p47 = scmp.eq.s32.totalorder %s21, 0
      %p48 = por %p46, %p47
      %s49 = ssub.s32 %s15, %s22
      %p50 = scmp.eq.s32.totalorder %s49, 0
      %s52 = sadd.s32 %s51, 1
      %s53 = scalar_select %p50, %s51, %s52
      %p56 = pneg %p50
      %p57 = scmp.eq.s32.totalorder %s15, 3
      %p58 = por %p56, %p57
      %p59 = scmp.ne.s32.totalorder %s51, %s54
      %p60 = scmp.eq.s32.totalorder %s15, 0
      %p61 = por %p59, %p60
      %p62 = scmp.ne.s32.totalorder %s51, %s54
      %p63 = scmp.eq.s32.totalorder %s20, 3
      %p64 = por %p62, %p63
      %p65 = scmp.ne.s32.totalorder %s54, %s55
      %p66 = scmp.eq.s32.totalorder %s20, 0
      %p67 = por %p65, %p66
      %p68 = scmp.ne.s32.totalorder %s54, %s55
      %p69 = scmp.eq.s32.totalorder %s21, 3
      %p70 = por %p68, %p69
      %p72 = scmp.ne.s32.totalorder %s55, %s71
      %p73 = scmp.eq.s32.totalorder %s21, 0
      %p74 = por %p72, %p73
      %s76 = sadd.s32 %s75, 1
      %p79 = scmp.eq.s32.totalorder %s15, 3
      %p80 = scmp.ne.s32.totalorder %s75, %s77
      %p81 = scmp.eq.s32.totalorder %s15, 0
      %p82 = por %p80, %p81
      %p83 = scmp.ne.s32.totalorder %s75, %s77
      %p84 = scmp.eq.s32.totalorder %s20, 3
      %p85 = por %p83, %p84
      %p86 = scmp.ne.s32.totalorder %s77, %s78
      %p87 = scmp.eq.s32.totalorder %s20, 0
      %p88 = por %p86, %p87
      %p89 = scmp.ne.s32.totalorder %s77, %s78
      %p90 = scmp.eq.s32.totalorder %s21, 3
      %p91 = por %p89, %p90
      %p93 = scmp.ne.s32.totalorder %s78, %s92
      %p94 = scmp.eq.s32.totalorder %s21, 0
      %p95 = por %p93, %p94
      %p96 = scmp.le.s32.totalorder 1, %s15
      %p97 = scmp.lt.s32.totalorder %s15, 5
      %p98 = pnand %p96, %p97
      %p99 = pneg %p98
      // Predicated region
      $region9: #{tpu_custom_call.1} parent=5 // pred_check
        _
      $region10: #{tpu_custom_call.1} parent=5 // pred_check_branch
        %101 = sbr.rel (%p98) target = $region12
      $region11: #{tpu_custom_call.1} parent=5 // pred_region
        %s102 = ssub.s32 %s15, 1
      $region12: #{tpu_custom_call.1} parent=5 // pred_fallthru
        _
      %p103 = scmp.lt.s32.totalorder %s15, 4
      // Predicated region
      $region13: #{tpu_custom_call.1} parent=5 // pred_check
        %p104 = pneg %p103
      $region14: #{tpu_custom_call.1} parent=5 // pred_check_branch
        %106 = sbr.rel (%p104) target = $region16
      $region15: #{tpu_custom_call.1} parent=5 // pred_region
        // Predicated region
        $region17: #{tpu_custom_call.1} parent=15 // pred_check
          %p107 = pneg %p35
        $region18: #{tpu_custom_call.1} parent=15 // pred_check_branch
          %109 = sbr.rel (%p107) target = $region20
        $region19: #{tpu_custom_call.1} parent=15 // pred_region
          %s110 = sand.u32 %s25, 1
          %s111 = scalar_lea.sflag [#allocation3], %s110
          %s112 = sand.u32 %s25, 1
          %s113 = smul.addr %s112, 64
          %s114 = scalar_lea.vmem [#allocation2], %s113
          %s115 = smul.u32 4, %s15
          %s117 = ssub.s32 1024, 1024
          %118 = vsyncadd %s111, %s117
          %s119 = smul.addr %s115, 128
          %s120 = scalar_lea.hbm %s0, %s119
          %s121 = sshll.u32 %s114, 4
          %s122 = int_to_ptr.vmem [resolvable:$true] %s121
          %127 = dma.hbm_to_vmem [thread:$0]  %s120, 1024, %s122, %s111, 2048, 512, 32
        $region20: #{tpu_custom_call.1} parent=15 // pred_fallthru
          _
        // Predicated region
        $region21: #{tpu_custom_call.1} parent=15 // pred_check
          %p128 = pneg %p61
        $region22: #{tpu_custom_call.1} parent=15 // pred_check_branch
          %130 = sbr.rel (%p128) target = $region24
        $region23: #{tpu_custom_call.1} parent=15 // pred_region
          %s131 = sand.u32 %s51, 1
          %s132 = scalar_lea.sflag [#allocation6], %s131
          %s133 = sand.u32 %s51, 1
          %s134 = smul.addr %s133, 3072
          %s135 = scalar_lea.vmem [#allocation5], %s134
          %s136 = smul.u32 64, %s15
          %s138 = ssub.s32 49152, 49152
          %139 = vsyncadd %s132, %s138
          %s140 = smul.addr %s136, 12
          %s141 = smul.addr %s140, 64
          %s142 = scalar_lea.hbm %s1, %s141
          %s143 = sshll.u32 %s135, 4
          %s144 = int_to_ptr.vmem [resolvable:$true] %s143
          %149 = dma.hbm_to_vmem [thread:$0]  %s142, 49152, %s144, %s132, 768, 768, 48
        $region24: #{tpu_custom_call.1} parent=15 // pred_fallthru
          _
      $region16: #{tpu_custom_call.1} parent=5 // pred_fallthru
        _
      %p150 = scmp.le.s32.totalorder 1, %s15
      %p151 = scmp.lt.s32.totalorder %s15, 5
      %p152 = pnand %p150, %p151
      %p153 = pneg %p152
      // Predicated region
      $region25: #{tpu_custom_call.1} parent=5 // pred_check
        _
      $region26: #{tpu_custom_call.1} parent=5 // pred_check_branch
        %155 = sbr.rel (%p152) target = $region28
      $region27: #{tpu_custom_call.1} parent=5 // pred_region
        %s156 = ssub.s32 %s15, 1
        %s157 = sand.u32 %s28, 1
        %s158 = scalar_lea.sflag [#allocation3], %s157
        %s159 = sand.u32 %s28, 1
        %s160 = smul.addr %s159, 64
        %s161 = scalar_lea.vmem [#allocation2], %s160
        // Predicated region
        $region29: #{tpu_custom_call.1} parent=27 // pred_check
          %p162 = pneg %p41
        $region30: #{tpu_custom_call.1} parent=27 // pred_check_branch
          %164 = sbr.rel (%p162) target = $region32
        $region31: #{tpu_custom_call.1} parent=27 // pred_region
          %165 = dma.done %s158, 1024
        $region32: #{tpu_custom_call.1} parent=27 // pred_fallthru
          _
        %s166 = sand.u32 %s54, 1
        %s167 = scalar_lea.sflag [#allocation6], %s166
        %s168 = sand.u32 %s54, 1
        %s169 = smul.addr %s168, 3072
        %s170 = scalar_lea.vmem [#allocation5], %s169
        // Predicated region
        $region33: #{tpu_custom_call.1} parent=27 // pred_check
          %p171 = pneg %p67
        $region34: #{tpu_custom_call.1} parent=27 // pred_check_branch
          %173 = sbr.rel (%p171) target = $region36
        $region35: #{tpu_custom_call.1} parent=27 // pred_region
          %174 = dma.done %s167, 49152
        $region36: #{tpu_custom_call.1} parent=27 // pred_fallthru
          _
        %s175 = sand.u32 %s28, 1
        %s176 = scalar_lea.sflag [#allocation3], %s175
        %s177 = sand.u32 %s28, 1
        %s178 = smul.addr %s177, 64
        %s179 = scalar_lea.vmem [#allocation2], %s178
        %p180 = pneg %p41
        %p181 = pneg %p38
        %s182 = sand.u32 %s54, 1
        %s183 = scalar_lea.sflag [#allocation6], %s182
        %s184 = sand.u32 %s54, 1
        %s185 = smul.addr %s184, 3072
        %s186 = scalar_lea.vmem [#allocation5], %s185
        %p187 = pneg %p67
        %p188 = pneg %p64
        %p189 = pneg %p88
        %p190 = pneg %p85
        %s191 = smul.u32 4, %s20
        %s192 = smul.u32 64, %s20
        %p193 = scmp.eq.s32.totalorder %s20, 0
        // Predicated region
        $region37: #{tpu_custom_call.1} parent=27 // pred_check
          %p194 = pneg %p193
        $region38: #{tpu_custom_call.1} parent=27 // pred_check_branch
          %196 = sbr.rel (%p194) target = $region40
        $region39: #{tpu_custom_call.1} parent=27 // pred_region
          %197 = vst [vmem:[#allocation7] sm:$0xff] 0.0
          %198 = vst [vmem:[#allocation7 + $0x8] sm:$0xff] 0.0
          %199 = vst [vmem:[#allocation7 + $0x10] sm:$0xff] 0.0
          %200 = vst [vmem:[#allocation7 + $0x18] sm:$0xff] 0.0
          %201 = vst [vmem:[#allocation7 + $0x20] sm:$0xff] 0.0
          %202 = vst [vmem:[#allocation7 + $0x28] sm:$0xff] 0.0
          %203 = vst [vmem:[#allocation7 + $0x30] sm:$0xff] 0.0
          %204 = vst [vmem:[#allocation7 + $0x38] sm:$0xff] 0.0
          %205 = vst [vmem:[#allocation7 + $0x40] sm:$0xff] 0.0
          %206 = vst [vmem:[#allocation7 + $0x48] sm:$0xff] 0.0
          %207 = vst [vmem:[#allocation7 + $0x50] sm:$0xff] 0.0
          %208 = vst [vmem:[#allocation7 + $0x58] sm:$0xff] 0.0
          %209 = vst [vmem:[#allocation7 + $0x60] sm:$0xff] 0.0
          %210 = vst [vmem:[#allocation7 + $0x68] sm:$0xff] 0.0
          %211 = vst [vmem:[#allocation7 + $0x70] sm:$0xff] 0.0
          %212 = vst [vmem:[#allocation7 + $0x78] sm:$0xff] 0.0
          %213 = vst [vmem:[#allocation7 + $0x80] sm:$0xff] 0.0
          %214 = vst [vmem:[#allocation7 + $0x88] sm:$0xff] 0.0
          %215 = vst [vmem:[#allocation7 + $0x90] sm:$0xff] 0.0
          %216 = vst [vmem:[#allocation7 + $0x98] sm:$0xff] 0.0
          %217 = vst [vmem:[#allocation7 + $0xa0] sm:$0xff] 0.0
          %218 = vst [vmem:[#allocation7 + $0xa8] sm:$0xff] 0.0
          %219 = vst [vmem:[#allocation7 + $0xb0] sm:$0xff] 0.0
          %220 = vst [vmem:[#allocation7 + $0xb8] sm:$0xff] 0.0
        $region40: #{tpu_custom_call.1} parent=27 // pred_fallthru
          _
        %v221 = vld [vmem:[#allocation7] sm:$0xff]
        %v222 = vld [vmem:[#allocation7 + $0x8] sm:$0xff]
        %v223 = vld [vmem:[#allocation7 + $0x10] sm:$0xff]
        %v224 = vld [vmem:[#allocation7 + $0x18] sm:$0xff]
        %v225 = vld [vmem:[#allocation7 + $0x20] sm:$0xff]
        %v226 = vld [vmem:[#allocation7 + $0x28] sm:$0xff]
        %v227 = vld [vmem:[#allocation7 + $0x30] sm:$0xff]
        %v228 = vld [vmem:[#allocation7 + $0x38] sm:$0xff]
        %v229 = vld [vmem:[#allocation7 + $0x40] sm:$0xff]
        %v230 = vld [vmem:[#allocation7 + $0x48] sm:$0xff]
        %v231 = vld [vmem:[#allocation7 + $0x50] sm:$0xff]
        %v232 = vld [vmem:[#allocation7 + $0x58] sm:$0xff]
        %v233 = vld [vmem:[#allocation7 + $0x60] sm:$0xff]
        %v234 = vld [vmem:[#allocation7 + $0x68] sm:$0xff]
        %v235 = vld [vmem:[#allocation7 + $0x70] sm:$0xff]
        %v236 = vld [vmem:[#allocation7 + $0x78] sm:$0xff]
        %v237 = vld [vmem:[#allocation7 + $0x80] sm:$0xff]
        %v238 = vld [vmem:[#allocation7 + $0x88] sm:$0xff]
        %v239 = vld [vmem:[#allocation7 + $0x90] sm:$0xff]
        %v240 = vld [vmem:[#allocation7 + $0x98] sm:$0xff]
        %v241 = vld [vmem:[#allocation7 + $0xa0] sm:$0xff]
        %v242 = vld [vmem:[#allocation7 + $0xa8] sm:$0xff]
        %v243 = vld [vmem:[#allocation7 + $0xb0] sm:$0xff]
        %v244 = vld [vmem:[#allocation7 + $0xb8] sm:$0xff]
        %v245 = vld [vmem:[%s161] sm:$0xff]
        %v246 = vld [vmem:[%s161 + $0x8] sm:$0xff]
        %v247 = vld [vmem:[%s161 + $0x10] sm:$0xff]
        %v248 = vld [vmem:[%s161 + $0x18] sm:$0xff]
        %v249 = vld [vmem:[%s161 + $0x20] sm:$0xff]
        %v250 = vld [vmem:[%s161 + $0x28] sm:$0xff]
        %v251 = vld [vmem:[%s161 + $0x30] sm:$0xff]
        %v252 = vld [vmem:[%s161 + $0x38] sm:$0xff]
        %v253 = vpack.c.bf16 %v249, %v245
        %v254 = vpack.c.bf16 %v250, %v246
        %v255 = vpack.c.bf16 %v251, %v247
        %v256 = vpack.c.bf16 %v252, %v248
        %v257 = vld [vmem:[%s170] sm:$0xff]
        %v258 = vld [vmem:[%s170 + $0x8] sm:$0xff]
        %v259 = vld [vmem:[%s170 + $0x10] sm:$0xff]
        %v260 = vld [vmem:[%s170 + $0x18] sm:$0xff]
        %v261 = vld [vmem:[%s170 + $0x20] sm:$0xff]
        %v262 = vld [vmem:[%s170 + $0x28] sm:$0xff]
        %v263 = vld [vmem:[%s170 + $0x30] sm:$0xff]
        %v264 = vld [vmem:[%s170 + $0x38] sm:$0xff]
        %v265 = vld [vmem:[%s170 + $0x40] sm:$0xff]
        %v266 = vld [vmem:[%s170 + $0x48] sm:$0xff]
        %v267 = vld [vmem:[%s170 + $0x50] sm:$0xff]
        %v268 = vld [vmem:[%s170 + $0x58] sm:$0xff]
        %v269 = vld [vmem:[%s170 + $0x60] sm:$0xff]
        %v270 = vld [vmem:[%s170 + $0x68] sm:$0xff]
        %v271 = vld [vmem:[%s170 + $0x70] sm:$0xff]
        %v272 = vld [vmem:[%s170 + $0x78] sm:$0xff]
        %v273 = vld [vmem:[%s170 + $0x80] sm:$0xff]
        %v274 = vld [vmem:[%s170 + $0x88] sm:$0xff]
        %v275 = vld [vmem:[%s170 + $0x90] sm:$0xff]
        %v276 = vld [vmem:[%s170 + $0x98] sm:$0xff]
        %v277 = vld [vmem:[%s170 + $0xa0] sm:$0xff]
        %v278 = vld [vmem:[%s170 + $0xa8] sm:$0xff]
        %v279 = vld [vmem:[%s170 + $0xb0] sm:$0xff]
        %v280 = vld [vmem:[%s170 + $0xb8] sm:$0xff]
        %v281 = vld [vmem:[%s170 + $0xc0] sm:$0xff]
        %v282 = vld [vmem:[%s170 + $0xc8] sm:$0xff]
        %v283 = vld [vmem:[%s170 + $0xd0] sm:$0xff]
        %v284 = vld [vmem:[%s170 + $0xd8] sm:$0xff]
        %v285 = vld [vmem:[%s170 + $0xe0] sm:$0xff]
        %v286 = vld [vmem:[%s170 + $0xe8] sm:$0xff]
        %v287 = vld [vmem:[%s170 + $0xf0] sm:$0xff]
        %v288 = vld [vmem:[%s170 + $0xf8] sm:$0xff]
        %v289 = vld [vmem:[%s170 + $0x100] sm:$0xff]
        %v290 = vld [vmem:[%s170 + $0x108] sm:$0xff]
        %v291 = vld [vmem:[%s170 + $0x110] sm:$0xff]
        %v292 = vld [vmem:[%s170 + $0x118] sm:$0xff]
        %v293 = vld [vmem:[%s170 + $0x120] sm:$0xff]
        %v294 = vld [vmem:[%s170 + $0x128] sm:$0xff]
        %v295 = vld [vmem:[%s170 + $0x130] sm:$0xff]
        %v296 = vld [vmem:[%s170 + $0x138] sm:$0xff]
        %v297 = vld [vmem:[%s170 + $0x140] sm:$0xff]
        %v298 = vld [vmem:[%s170 + $0x148] sm:$0xff]
        %v299 = vld [vmem:[%s170 + $0x150] sm:$0xff]
        %v300 = vld [vmem:[%s170 + $0x158] sm:$0xff]
        %v301 = vld [vmem:[%s170 + $0x160] sm:$0xff]
        %v302 = vld [vmem:[%s170 + $0x168] sm:$0xff]
        %v303 = vld [vmem:[%s170 + $0x170] sm:$0xff]
        %v304 = vld [vmem:[%s170 + $0x178] sm:$0xff]
        %v305 = vld [vmem:[%s170 + $0x180] sm:$0xff]
        %v306 = vld [vmem:[%s170 + $0x188] sm:$0xff]
        %v307 = vld [vmem:[%s170 + $0x190] sm:$0xff]
        %v308 = vld [vmem:[%s170 + $0x198] sm:$0xff]
        %v309 = vld [vmem:[%s170 + $0x1a0] sm:$0xff]
        %v310 = vld [vmem:[%s170 + $0x1a8] sm:$0xff]
        %v311 = vld [vmem:[%s170 + $0x1b0] sm:$0xff]
        %v312 = vld [vmem:[%s170 + $0x1b8] sm:$0xff]
        %v313 = vld [vmem:[%s170 + $0x1c0] sm:$0xff]
        %v314 = vld [vmem:[%s170 + $0x1c8] sm:$0xff]
        %v315 = vld [vmem:[%s170 + $0x1d0] sm:$0xff]
        %v316 = vld [vmem:[%s170 + $0x1d8] sm:$0xff]
        %v317 = vld [vmem:[%s170 + $0x1e0] sm:$0xff]
        %v318 = vld [vmem:[%s170 + $0x1e8] sm:$0xff]
        %v319 = vld [vmem:[%s170 + $0x1f0] sm:$0xff]
        %v320 = vld [vmem:[%s170 + $0x1f8] sm:$0xff]
        %v321 = vld [vmem:[%s170 + $0x200] sm:$0xff]
        %v322 = vld [vmem:[%s170 + $0x208] sm:$0xff]
        %v323 = vld [vmem:[%s170 + $0x210] sm:$0xff]
        %v324 = vld [vmem:[%s170 + $0x218] sm:$0xff]
        %v325 = vld [vmem:[%s170 + $0x220] sm:$0xff]
        %v326 = vld [vmem:[%s170 + $0x228] sm:$0xff]
        %v327 = vld [vmem:[%s170 + $0x230] sm:$0xff]
        %v328 = vld [vmem:[%s170 + $0x238] sm:$0xff]
        %v329 = vld [vmem:[%s170 + $0x240] sm:$0xff]
        %v330 = vld [vmem:[%s170 + $0x248] sm:$0xff]
        %v331 = vld [vmem:[%s170 + $0x250] sm:$0xff]
        %v332 = vld [vmem:[%s170 + $0x258] sm:$0xff]
        %v333 = vld [vmem:[%s170 + $0x260] sm:$0xff]
        %v334 = vld [vmem:[%s170 + $0x268] sm:$0xff]
        %v335 = vld [vmem:[%s170 + $0x270] sm:$0xff]
        %v336 = vld [vmem:[%s170 + $0x278] sm:$0xff]
        %v337 = vld [vmem:[%s170 + $0x280] sm:$0xff]
        %v338 = vld [vmem:[%s170 + $0x288] sm:$0xff]
        %v339 = vld [vmem:[%s170 + $0x290] sm:$0xff]
        %v340 = vld [vmem:[%s170 + $0x298] sm:$0xff]
        %v341 = vld [vmem:[%s170 + $0x2a0] sm:$0xff]
        %v342 = vld [vmem:[%s170 + $0x2a8] sm:$0xff]
        %v343 = vld [vmem:[%s170 + $0x2b0] sm:$0xff]
        %v344 = vld [vmem:[%s170 + $0x2b8] sm:$0xff]
        %v345 = vld [vmem:[%s170 + $0x2c0] sm:$0xff]
        %v346 = vld [vmem:[%s170 + $0x2c8] sm:$0xff]
        %v347 = vld [vmem:[%s170 + $0x2d0] sm:$0xff]
        %v348 = vld [vmem:[%s170 + $0x2d8] sm:$0xff]
        %v349 = vld [vmem:[%s170 + $0x2e0] sm:$0xff]
        %v350 = vld [vmem:[%s170 + $0x2e8] sm:$0xff]
        %v351 = vld [vmem:[%s170 + $0x2f0] sm:$0xff]
        %v352 = vld [vmem:[%s170 + $0x2f8] sm:$0xff]
        %v353 = vld [vmem:[%s170 + $0x300] sm:$0xff]
        %v354 = vld [vmem:[%s170 + $0x308] sm:$0xff]
        %v355 = vld [vmem:[%s170 + $0x310] sm:$0xff]
        %v356 = vld [vmem:[%s170 + $0x318] sm:$0xff]
        %v357 = vld [vmem:[%s170 + $0x320] sm:$0xff]
        %v358 = vld [vmem:[%s170 + $0x328] sm:$0xff]
        %v359 = vld [vmem:[%s170 + $0x330] sm:$0xff]
        %v360 = vld [vmem:[%s170 + $0x338] sm:$0xff]
        %v361 = vld [vmem:[%s170 + $0x340] sm:$0xff]
        %v362 = vld [vmem:[%s170 + $0x348] sm:$0xff]
        %v363 = vld [vmem:[%s170 + $0x350] sm:$0xff]
        %v364 = vld [vmem:[%s170 + $0x358] sm:$0xff]
        %v365 = vld [vmem:[%s170 + $0x360] sm:$0xff]
        %v366 = vld [vmem:[%s170 + $0x368] sm:$0xff]
        %v367 = vld [vmem:[%s170 + $0x370] sm:$0xff]
        %v368 = vld [vmem:[%s170 + $0x378] sm:$0xff]
        %v369 = vld [vmem:[%s170 + $0x380] sm:$0xff]
        %v370 = vld [vmem:[%s170 + $0x388] sm:$0xff]
        %v371 = vld [vmem:[%s170 + $0x390] sm:$0xff]
        %v372 = vld [vmem:[%s170 + $0x398] sm:$0xff]
        %v373 = vld [vmem:[%s170 + $0x3a0] sm:$0xff]
        %v374 = vld [vmem:[%s170 + $0x3a8] sm:$0xff]
        %v375 = vld [vmem:[%s170 + $0x3b0] sm:$0xff]
        %v376 = vld [vmem:[%s170 + $0x3b8] sm:$0xff]
        %v377 = vld [vmem:[%s170 + $0x3c0] sm:$0xff]
        %v378 = vld [vmem:[%s170 + $0x3c8] sm:$0xff]
        %v379 = vld [vmem:[%s170 + $0x3d0] sm:$0xff]
        %v380 = vld [vmem:[%s170 + $0x3d8] sm:$0xff]
        %v381 = vld [vmem:[%s170 + $0x3e0] sm:$0xff]
        %v382 = vld [vmem:[%s170 + $0x3e8] sm:$0xff]
        %v383 = vld [vmem:[%s170 + $0x3f0] sm:$0xff]
        %v384 = vld [vmem:[%s170 + $0x3f8] sm:$0xff]
        %v385 = vld [vmem:[%s170 + $0x400] sm:$0xff]
        %v386 = vld [vmem:[%s170 + $0x408] sm:$0xff]
        %v387 = vld [vmem:[%s170 + $0x410] sm:$0xff]
        %v388 = vld [vmem:[%s170 + $0x418] sm:$0xff]
        %v389 = vld [vmem:[%s170 + $0x420] sm:$0xff]
        %v390 = vld [vmem:[%s170 + $0x428] sm:$0xff]
        %v391 = vld [vmem:[%s170 + $0x430] sm:$0xff]
        %v392 = vld [vmem:[%s170 + $0x438] sm:$0xff]
        %v393 = vld [vmem:[%s170 + $0x440] sm:$0xff]
        %v394 = vld [vmem:[%s170 + $0x448] sm:$0xff]
        %v395 = vld [vmem:[%s170 + $0x450] sm:$0xff]
        %v396 = vld [vmem:[%s170 + $0x458] sm:$0xff]
        %v397 = vld [vmem:[%s170 + $0x460] sm:$0xff]
        %v398 = vld [vmem:[%s170 + $0x468] sm:$0xff]
        %v399 = vld [vmem:[%s170 + $0x470] sm:$0xff]
        %v400 = vld [vmem:[%s170 + $0x478] sm:$0xff]
        %v401 = vld [vmem:[%s170 + $0x480] sm:$0xff]
        %v402 = vld [vmem:[%s170 + $0x488] sm:$0xff]
        %v403 = vld [vmem:[%s170 + $0x490] sm:$0xff]
        %v404 = vld [vmem:[%s170 + $0x498] sm:$0xff]
        %v405 = vld [vmem:[%s170 + $0x4a0] sm:$0xff]
        %v406 = vld [vmem:[%s170 + $0x4a8] sm:$0xff]
        %v407 = vld [vmem:[%s170 + $0x4b0] sm:$0xff]
        %v408 = vld [vmem:[%s170 + $0x4b8] sm:$0xff]
        %v409 = vld [vmem:[%s170 + $0x4c0] sm:$0xff]
        %v410 = vld [vmem:[%s170 + $0x4c8] sm:$0xff]
        %v411 = vld [vmem:[%s170 + $0x4d0] sm:$0xff]
        %v412 = vld [vmem:[%s170 + $0x4d8] sm:$0xff]
        %v413 = vld [vmem:[%s170 + $0x4e0] sm:$0xff]
        %v414 = vld [vmem:[%s170 + $0x4e8] sm:$0xff]
        %v415 = vld [vmem:[%s170 + $0x4f0] sm:$0xff]
        %v416 = vld [vmem:[%s170 + $0x4f8] sm:$0xff]
        %v417 = vld [vmem:[%s170 + $0x500] sm:$0xff]
        %v418 = vld [vmem:[%s170 + $0x508] sm:$0xff]
        %v419 = vld [vmem:[%s170 + $0x510] sm:$0xff]
        %v420 = vld [vmem:[%s170 + $0x518] sm:$0xff]
        %v421 = vld [vmem:[%s170 + $0x520] sm:$0xff]
        %v422 = vld [vmem:[%s170 + $0x528] sm:$0xff]
        %v423 = vld [vmem:[%s170 + $0x530] sm:$0xff]
        %v424 = vld [vmem:[%s170 + $0x538] sm:$0xff]
        %v425 = vld [vmem:[%s170 + $0x540] sm:$0xff]
        %v426 = vld [vmem:[%s170 + $0x548] sm:$0xff]
        %v427 = vld [vmem:[%s170 + $0x550] sm:$0xff]
        %v428 = vld [vmem:[%s170 + $0x558] sm:$0xff]
        %v429 = vld [vmem:[%s170 + $0x560] sm:$0xff]
        %v430 = vld [vmem:[%s170 + $0x568] sm:$0xff]
        %v431 = vld [vmem:[%s170 + $0x570] sm:$0xff]
        %v432 = vld [vmem:[%s170 + $0x578] sm:$0xff]
        %v433 = vld [vmem:[%s170 + $0x580] sm:$0xff]
        %v434 = vld [vmem:[%s170 + $0x588] sm:$0xff]
        %v435 = vld [vmem:[%s170 + $0x590] sm:$0xff]
        %v436 = vld [vmem:[%s170 + $0x598] sm:$0xff]
        %v437 = vld [vmem:[%s170 + $0x5a0] sm:$0xff]
        %v438 = vld [vmem:[%s170 + $0x5a8] sm:$0xff]
        %v439 = vld [vmem:[%s170 + $0x5b0] sm:$0xff]
        %v440 = vld [vmem:[%s170 + $0x5b8] sm:$0xff]
        %v441 = vld [vmem:[%s170 + $0x5c0] sm:$0xff]
        %v442 = vld [vmem:[%s170 + $0x5c8] sm:$0xff]
        %v443 = vld [vmem:[%s170 + $0x5d0] sm:$0xff]
        %v444 = vld [vmem:[%s170 + $0x5d8] sm:$0xff]
        %v445 = vld [vmem:[%s170 + $0x5e0] sm:$0xff]
        %v446 = vld [vmem:[%s170 + $0x5e8] sm:$0xff]
        %v447 = vld [vmem:[%s170 + $0x5f0] sm:$0xff]
        %v448 = vld [vmem:[%s170 + $0x5f8] sm:$0xff]
        %v449 = vld [vmem:[%s170 + $0x600] sm:$0xff]
        %v450 = vld [vmem:[%s170 + $0x608] sm:$0xff]
        %v451 = vld [vmem:[%s170 + $0x610] sm:$0xff]
        %v452 = vld [vmem:[%s170 + $0x618] sm:$0xff]
        %v453 = vld [vmem:[%s170 + $0x620] sm:$0xff]
        %v454 = vld [vmem:[%s170 + $0x628] sm:$0xff]
        %v455 = vld [vmem:[%s170 + $0x630] sm:$0xff]
        %v456 = vld [vmem:[%s170 + $0x638] sm:$0xff]
        %v457 = vld [vmem:[%s170 + $0x640] sm:$0xff]
        %v458 = vld [vmem:[%s170 + $0x648] sm:$0xff]
        %v459 = vld [vmem:[%s170 + $0x650] sm:$0xff]
        %v460 = vld [vmem:[%s170 + $0x658] sm:$0xff]
        %v461 = vld [vmem:[%s170 + $0x660] sm:$0xff]
        %v462 = vld [vmem:[%s170 + $0x668] sm:$0xff]
        %v463 = vld [vmem:[%s170 + $0x670] sm:$0xff]
        %v464 = vld [vmem:[%s170 + $0x678] sm:$0xff]
        %v465 = vld [vmem:[%s170 + $0x680] sm:$0xff]
        %v466 = vld [vmem:[%s170 + $0x688] sm:$0xff]
        %v467 = vld [vmem:[%s170 + $0x690] sm:$0xff]
        %v468 = vld [vmem:[%s170 + $0x698] sm:$0xff]
        %v469 = vld [vmem:[%s170 + $0x6a0] sm:$0xff]
        %v470 = vld [vmem:[%s170 + $0x6a8] sm:$0xff]
        %v471 = vld [vmem:[%s170 + $0x6b0] sm:$0xff]
        %v472 = vld [vmem:[%s170 + $0x6b8] sm:$0xff]
        %v473 = vld [vmem:[%s170 + $0x6c0] sm:$0xff]
        %v474 = vld [vmem:[%s170 + $0x6c8] sm:$0xff]
        %v475 = vld [vmem:[%s170 + $0x6d0] sm:$0xff]
        %v476 = vld [vmem:[%s170 + $0x6d8] sm:$0xff]
        %v477 = vld [vmem:[%s170 + $0x6e0] sm:$0xff]
        %v478 = vld [vmem:[%s170 + $0x6e8] sm:$0xff]
        %v479 = vld [vmem:[%s170 + $0x6f0] sm:$0xff]
        %v480 = vld [vmem:[%s170 + $0x6f8] sm:$0xff]
        %v481 = vld [vmem:[%s170 + $0x700] sm:$0xff]
        %v482 = vld [vmem:[%s170 + $0x708] sm:$0xff]
        %v483 = vld [vmem:[%s170 + $0x710] sm:$0xff]
        %v484 = vld [vmem:[%s170 + $0x718] sm:$0xff]
        %v485 = vld [vmem:[%s170 + $0x720] sm:$0xff]
        %v486 = vld [vmem:[%s170 + $0x728] sm:$0xff]
        %v487 = vld [vmem:[%s170 + $0x730] sm:$0xff]
        %v488 = vld [vmem:[%s170 + $0x738] sm:$0xff]
        %v489 = vld [vmem:[%s170 + $0x740] sm:$0xff]
        %v490 = vld [vmem:[%s170 + $0x748] sm:$0xff]
        %v491 = vld [vmem:[%s170 + $0x750] sm:$0xff]
        %v492 = vld [vmem:[%s170 + $0x758] sm:$0xff]
        %v493 = vld [vmem:[%s170 + $0x760] sm:$0xff]
        %v494 = vld [vmem:[%s170 + $0x768] sm:$0xff]
        %v495 = vld [vmem:[%s170 + $0x770] sm:$0xff]
        %v496 = vld [vmem:[%s170 + $0x778] sm:$0xff]
        %v497 = vld [vmem:[%s170 + $0x780] sm:$0xff]
        %v498 = vld [vmem:[%s170 + $0x788] sm:$0xff]
        %v499 = vld [vmem:[%s170 + $0x790] sm:$0xff]
        %v500 = vld [vmem:[%s170 + $0x798] sm:$0xff]
        %v501 = vld [vmem:[%s170 + $0x7a0] sm:$0xff]
        %v502 = vld [vmem:[%s170 + $0x7a8] sm:$0xff]
        %v503 = vld [vmem:[%s170 + $0x7b0] sm:$0xff]
        %v504 = vld [vmem:[%s170 + $0x7b8] sm:$0xff]
        %v505 = vld [vmem:[%s170 + $0x7c0] sm:$0xff]
        %v506 = vld [vmem:[%s170 + $0x7c8] sm:$0xff]
        %v507 = vld [vmem:[%s170 + $0x7d0] sm:$0xff]
        %v508 = vld [vmem:[%s170 + $0x7d8] sm:$0xff]
        %v509 = vld [vmem:[%s170 + $0x7e0] sm:$0xff]
        %v510 = vld [vmem:[%s170 + $0x7e8] sm:$0xff]
        %v511 = vld [vmem:[%s170 + $0x7f0] sm:$0xff]
        %v512 = vld [vmem:[%s170 + $0x7f8] sm:$0xff]
        %v513 = vld [vmem:[%s170 + $0x800] sm:$0xff]
        %v514 = vld [vmem:[%s170 + $0x808] sm:$0xff]
        %v515 = vld [vmem:[%s170 + $0x810] sm:$0xff]
        %v516 = vld [vmem:[%s170 + $0x818] sm:$0xff]
        %v517 = vld [vmem:[%s170 + $0x820] sm:$0xff]
        %v518 = vld [vmem:[%s170 + $0x828] sm:$0xff]
        %v519 = vld [vmem:[%s170 + $0x830] sm:$0xff]
        %v520 = vld [vmem:[%s170 + $0x838] sm:$0xff]
        %v521 = vld [vmem:[%s170 + $0x840] sm:$0xff]
        %v522 = vld [vmem:[%s170 + $0x848] sm:$0xff]
        %v523 = vld [vmem:[%s170 + $0x850] sm:$0xff]
        %v524 = vld [vmem:[%s170 + $0x858] sm:$0xff]
        %v525 = vld [vmem:[%s170 + $0x860] sm:$0xff]
        %v526 = vld [vmem:[%s170 + $0x868] sm:$0xff]
        %v527 = vld [vmem:[%s170 + $0x870] sm:$0xff]
        %v528 = vld [vmem:[%s170 + $0x878] sm:$0xff]
        %v529 = vld [vmem:[%s170 + $0x880] sm:$0xff]
        %v530 = vld [vmem:[%s170 + $0x888] sm:$0xff]
        %v531 = vld [vmem:[%s170 + $0x890] sm:$0xff]
        %v532 = vld [vmem:[%s170 + $0x898] sm:$0xff]
        %v533 = vld [vmem:[%s170 + $0x8a0] sm:$0xff]
        %v534 = vld [vmem:[%s170 + $0x8a8] sm:$0xff]
        %v535 = vld [vmem:[%s170 + $0x8b0] sm:$0xff]
        %v536 = vld [vmem:[%s170 + $0x8b8] sm:$0xff]
        %v537 = vld [vmem:[%s170 + $0x8c0] sm:$0xff]
        %v538 = vld [vmem:[%s170 + $0x8c8] sm:$0xff]
        %v539 = vld [vmem:[%s170 + $0x8d0] sm:$0xff]
        %v540 = vld [vmem:[%s170 + $0x8d8] sm:$0xff]
        %v541 = vld [vmem:[%s170 + $0x8e0] sm:$0xff]
        %v542 = vld [vmem:[%s170 + $0x8e8] sm:$0xff]
        %v543 = vld [vmem:[%s170 + $0x8f0] sm:$0xff]
        %v544 = vld [vmem:[%s170 + $0x8f8] sm:$0xff]
        %v545 = vld [vmem:[%s170 + $0x900] sm:$0xff]
        %v546 = vld [vmem:[%s170 + $0x908] sm:$0xff]
        %v547 = vld [vmem:[%s170 + $0x910] sm:$0xff]
        %v548 = vld [vmem:[%s170 + $0x918] sm:$0xff]
        %v549 = vld [vmem:[%s170 + $0x920] sm:$0xff]
        %v550 = vld [vmem:[%s170 + $0x928] sm:$0xff]
        %v551 = vld [vmem:[%s170 + $0x930] sm:$0xff]
        %v552 = vld [vmem:[%s170 + $0x938] sm:$0xff]
        %v553 = vld [vmem:[%s170 + $0x940] sm:$0xff]
        %v554 = vld [vmem:[%s170 + $0x948] sm:$0xff]
        %v555 = vld [vmem:[%s170 + $0x950] sm:$0xff]
        %v556 = vld [vmem:[%s170 + $0x958] sm:$0xff]
        %v557 = vld [vmem:[%s170 + $0x960] sm:$0xff]
        %v558 = vld [vmem:[%s170 + $0x968] sm:$0xff]
        %v559 = vld [vmem:[%s170 + $0x970] sm:$0xff]
        %v560 = vld [vmem:[%s170 + $0x978] sm:$0xff]
        %v561 = vld [vmem:[%s170 + $0x980] sm:$0xff]
        %v562 = vld [vmem:[%s170 + $0x988] sm:$0xff]
        %v563 = vld [vmem:[%s170 + $0x990] sm:$0xff]
        %v564 = vld [vmem:[%s170 + $0x998] sm:$0xff]
        %v565 = vld [vmem:[%s170 + $0x9a0] sm:$0xff]
        %v566 = vld [vmem:[%s170 + $0x9a8] sm:$0xff]
        %v567 = vld [vmem:[%s170 + $0x9b0] sm:$0xff]
        %v568 = vld [vmem:[%s170 + $0x9b8] sm:$0xff]
        %v569 = vld [vmem:[%s170 + $0x9c0] sm:$0xff]
        %v570 = vld [vmem:[%s170 + $0x9c8] sm:$0xff]
        %v571 = vld [vmem:[%s170 + $0x9d0] sm:$0xff]
        %v572 = vld [vmem:[%s170 + $0x9d8] sm:$0xff]
        %v573 = vld [vmem:[%s170 + $0x9e0] sm:$0xff]
        %v574 = vld [vmem:[%s170 + $0x9e8] sm:$0xff]
        %v575 = vld [vmem:[%s170 + $0x9f0] sm:$0xff]
        %v576 = vld [vmem:[%s170 + $0x9f8] sm:$0xff]
        %v577 = vld [vmem:[%s170 + $0xa00] sm:$0xff]
        %v578 = vld [vmem:[%s170 + $0xa08] sm:$0xff]
        %v579 = vld [vmem:[%s170 + $0xa10] sm:$0xff]
        %v580 = vld [vmem:[%s170 + $0xa18] sm:$0xff]
        %v581 = vld [vmem:[%s170 + $0xa20] sm:$0xff]
        %v582 = vld [vmem:[%s170 + $0xa28] sm:$0xff]
        %v583 = vld [vmem:[%s170 + $0xa30] sm:$0xff]
        %v584 = vld [vmem:[%s170 + $0xa38] sm:$0xff]
        %v585 = vld [vmem:[%s170 + $0xa40] sm:$0xff]
        %v586 = vld [vmem:[%s170 + $0xa48] sm:$0xff]
        %v587 = vld [vmem:[%s170 + $0xa50] sm:$0xff]
        %v588 = vld [vmem:[%s170 + $0xa58] sm:$0xff]
        %v589 = vld [vmem:[%s170 + $0xa60] sm:$0xff]
        %v590 = vld [vmem:[%s170 + $0xa68] sm:$0xff]
        %v591 = vld [vmem:[%s170 + $0xa70] sm:$0xff]
        %v592 = vld [vmem:[%s170 + $0xa78] sm:$0xff]
        %v593 = vld [vmem:[%s170 + $0xa80] sm:$0xff]
        %v594 = vld [vmem:[%s170 + $0xa88] sm:$0xff]
        %v595 = vld [vmem:[%s170 + $0xa90] sm:$0xff]
        %v596 = vld [vmem:[%s170 + $0xa98] sm:$0xff]
        %v597 = vld [vmem:[%s170 + $0xaa0] sm:$0xff]
        %v598 = vld [vmem:[%s170 + $0xaa8] sm:$0xff]
        %v599 = vld [vmem:[%s170 + $0xab0] sm:$0xff]
        %v600 = vld [vmem:[%s170 + $0xab8] sm:$0xff]
        %v601 = vld [vmem:[%s170 + $0xac0] sm:$0xff]
        %v602 = vld [vmem:[%s170 + $0xac8] sm:$0xff]
        %v603 = vld [vmem:[%s170 + $0xad0] sm:$0xff]
        %v604 = vld [vmem:[%s170 + $0xad8] sm:$0xff]
        %v605 = vld [vmem:[%s170 + $0xae0] sm:$0xff]
        %v606 = vld [vmem:[%s170 + $0xae8] sm:$0xff]
        %v607 = vld [vmem:[%s170 + $0xaf0] sm:$0xff]
        %v608 = vld [vmem:[%s170 + $0xaf8] sm:$0xff]
        %v609 = vld [vmem:[%s170 + $0xb00] sm:$0xff]
        %v610 = vld [vmem:[%s170 + $0xb08] sm:$0xff]
        %v611 = vld [vmem:[%s170 + $0xb10] sm:$0xff]
        %v612 = vld [vmem:[%s170 + $0xb18] sm:$0xff]
        %v613 = vld [vmem:[%s170 + $0xb20] sm:$0xff]
        %v614 = vld [vmem:[%s170 + $0xb28] sm:$0xff]
        %v615 = vld [vmem:[%s170 + $0xb30] sm:$0xff]
        %v616 = vld [vmem:[%s170 + $0xb38] sm:$0xff]
        %v617 = vld [vmem:[%s170 + $0xb40] sm:$0xff]
        %v618 = vld [vmem:[%s170 + $0xb48] sm:$0xff]
        %v619 = vld [vmem:[%s170 + $0xb50] sm:$0xff]
        %v620 = vld [vmem:[%s170 + $0xb58] sm:$0xff]
        %v621 = vld [vmem:[%s170 + $0xb60] sm:$0xff]
        %v622 = vld [vmem:[%s170 + $0xb68] sm:$0xff]
        %v623 = vld [vmem:[%s170 + $0xb70] sm:$0xff]
        %v624 = vld [vmem:[%s170 + $0xb78] sm:$0xff]
        %v625 = vld [vmem:[%s170 + $0xb80] sm:$0xff]
        %v626 = vld [vmem:[%s170 + $0xb88] sm:$0xff]
        %v627 = vld [vmem:[%s170 + $0xb90] sm:$0xff]
        %v628 = vld [vmem:[%s170 + $0xb98] sm:$0xff]
        %v629 = vld [vmem:[%s170 + $0xba0] sm:$0xff]
        %v630 = vld [vmem:[%s170 + $0xba8] sm:$0xff]
        %v631 = vld [vmem:[%s170 + $0xbb0] sm:$0xff]
        %v632 = vld [vmem:[%s170 + $0xbb8] sm:$0xff]
        %v633 = vld [vmem:[%s170 + $0xbc0] sm:$0xff]
        %v634 = vld [vmem:[%s170 + $0xbc8] sm:$0xff]
        %v635 = vld [vmem:[%s170 + $0xbd0] sm:$0xff]
        %v636 = vld [vmem:[%s170 + $0xbd8] sm:$0xff]
        %v637 = vld [vmem:[%s170 + $0xbe0] sm:$0xff]
        %v638 = vld [vmem:[%s170 + $0xbe8] sm:$0xff]
        %v639 = vld [vmem:[%s170 + $0xbf0] sm:$0xff]
        %v640 = vld [vmem:[%s170 + $0xbf8] sm:$0xff]
        %v1025 = vunpack.c.l.b16 %v257
        %v1026 = vunpack.c.h.b16 %v257
        %v1027 = vunpack.c.l.b16 %v258
        %v1028 = vunpack.c.h.b16 %v258
        %v1029 = vunpack.c.l.b16 %v259
        %v1030 = vunpack.c.h.b16 %v259
        %v1031 = vunpack.c.l.b16 %v260
        %v1032 = vunpack.c.h.b16 %v260
        %v1033 = vunpack.c.l.b16 %v261
        %v1034 = vunpack.c.h.b16 %v261
        %v1035 = vunpack.c.l.b16 %v262
        %v1036 = vunpack.c.h.b16 %v262
        %v1037 = vunpack.c.l.b16 %v263
        %v1038 = vunpack.c.h.b16 %v263
        %v1039 = vunpack.c.l.b16 %v264
        %v1040 = vunpack.c.h.b16 %v264
        %v1041 = vunpack.c.l.b16 %v265
        %v1042 = vunpack.c.h.b16 %v265
        %v1043 = vunpack.c.l.b16 %v266
        %v1044 = vunpack.c.h.b16 %v266
        %v1045 = vunpack.c.l.b16 %v267
        %v1046 = vunpack.c.h.b16 %v267
        %v1047 = vunpack.c.l.b16 %v268
        %v1048 = vunpack.c.h.b16 %v268
        %v1049 = vunpack.c.l.b16 %v269
        %v1050 = vunpack.c.h.b16 %v269
        %v1051 = vunpack.c.l.b16 %v270
        %v1052 = vunpack.c.h.b16 %v270
        %v1053 = vunpack.c.l.b16 %v271
        %v1054 = vunpack.c.h.b16 %v271
        %v1055 = vunpack.c.l.b16 %v272
        %v1056 = vunpack.c.h.b16 %v272
        %v1057 = vunpack.c.l.b16 %v273
        %v1058 = vunpack.c.h.b16 %v273
        %v1059 = vunpack.c.l.b16 %v274
        %v1060 = vunpack.c.h.b16 %v274
        %v1061 = vunpack.c.l.b16 %v275
        %v1062 = vunpack.c.h.b16 %v275
        %v1063 = vunpack.c.l.b16 %v276
        %v1064 = vunpack.c.h.b16 %v276
        %v1065 = vunpack.c.l.b16 %v277
        %v1066 = vunpack.c.h.b16 %v277
        %v1067 = vunpack.c.l.b16 %v278
        %v1068 = vunpack.c.h.b16 %v278
        %v1069 = vunpack.c.l.b16 %v279
        %v1070 = vunpack.c.h.b16 %v279
        %v1071 = vunpack.c.l.b16 %v280
        %v1072 = vunpack.c.h.b16 %v280
        %v1073 = vunpack.c.l.b16 %v281
        %v1074 = vunpack.c.h.b16 %v281
        %v1075 = vunpack.c.l.b16 %v282
        %v1076 = vunpack.c.h.b16 %v282
        %v1077 = vunpack.c.l.b16 %v283
        %v1078 = vunpack.c.h.b16 %v283
        %v1079 = vunpack.c.l.b16 %v284
        %v1080 = vunpack.c.h.b16 %v284
        %v1081 = vunpack.c.l.b16 %v285
        %v1082 = vunpack.c.h.b16 %v285
        %v1083 = vunpack.c.l.b16 %v286
        %v1084 = vunpack.c.h.b16 %v286
        %v1085 = vunpack.c.l.b16 %v287
        %v1086 = vunpack.c.h.b16 %v287
        %v1087 = vunpack.c.l.b16 %v288
        %v1088 = vunpack.c.h.b16 %v288
        %v1089 = vunpack.c.l.b16 %v289
        %v1090 = vunpack.c.h.b16 %v289
        %v1091 = vunpack.c.l.b16 %v290
        %v1092 = vunpack.c.h.b16 %v290
        %v1093 = vunpack.c.l.b16 %v291
        %v1094 = vunpack.c.h.b16 %v291
        %v1095 = vunpack.c.l.b16 %v292
        %v1096 = vunpack.c.h.b16 %v292
        %v1097 = vunpack.c.l.b16 %v293
        %v1098 = vunpack.c.h.b16 %v293
        %v1099 = vunpack.c.l.b16 %v294
        %v1100 = vunpack.c.h.b16 %v294
        %v1101 = vunpack.c.l.b16 %v295
        %v1102 = vunpack.c.h.b16 %v295
        %v1103 = vunpack.c.l.b16 %v296
        %v1104 = vunpack.c.h.b16 %v296
        %v1105 = vunpack.c.l.b16 %v297
        %v1106 = vunpack.c.h.b16 %v297
        %v1107 = vunpack.c.l.b16 %v298
        %v1108 = vunpack.c.h.b16 %v298
        %v1109 = vunpack.c.l.b16 %v299
        %v1110 = vunpack.c.h.b16 %v299
        %v1111 = vunpack.c.l.b16 %v300
        %v1112 = vunpack.c.h.b16 %v300
        %v1113 = vunpack.c.l.b16 %v301
        %v1114 = vunpack.c.h.b16 %v301
        %v1115 = vunpack.c.l.b16 %v302
        %v1116 = vunpack.c.h.b16 %v302
        %v1117 = vunpack.c.l.b16 %v303
        %v1118 = vunpack.c.h.b16 %v303
        %v1119 = vunpack.c.l.b16 %v304
        %v1120 = vunpack.c.h.b16 %v304
        %v1121 = vunpack.c.l.b16 %v305
        %v1122 = vunpack.c.h.b16 %v305
        %v1123 = vunpack.c.l.b16 %v306
        %v1124 = vunpack.c.h.b16 %v306
        %v1125 = vunpack.c.l.b16 %v307
        %v1126 = vunpack.c.h.b16 %v307
        %v1127 = vunpack.c.l.b16 %v308
        %v1128 = vunpack.c.h.b16 %v308
        %v1129 = vunpack.c.l.b16 %v309
        %v1130 = vunpack.c.h.b16 %v309
        %v1131 = vunpack.c.l.b16 %v310
        %v1132 = vunpack.c.h.b16 %v310
        %v1133 = vunpack.c.l.b16 %v311
        %v1134 = vunpack.c.h.b16 %v311
        %v1135 = vunpack.c.l.b16 %v312
        %v1136 = vunpack.c.h.b16 %v312
        %v1137 = vunpack.c.l.b16 %v313
        %v1138 = vunpack.c.h.b16 %v313
        %v1139 = vunpack.c.l.b16 %v314
        %v1140 = vunpack.c.h.b16 %v314
        %v1141 = vunpack.c.l.b16 %v315
        %v1142 = vunpack.c.h.b16 %v315
        %v1143 = vunpack.c.l.b16 %v316
        %v1144 = vunpack.c.h.b16 %v316
        %v1145 = vunpack.c.l.b16 %v317
        %v1146 = vunpack.c.h.b16 %v317
        %v1147 = vunpack.c.l.b16 %v318
        %v1148 = vunpack.c.h.b16 %v318
        %v1149 = vunpack.c.l.b16 %v319
        %v1150 = vunpack.c.h.b16 %v319
        %v1151 = vunpack.c.l.b16 %v320
        %v1152 = vunpack.c.h.b16 %v320
        %v1153 = vunpack.c.l.b16 %v321
        %v1154 = vunpack.c.h.b16 %v321
        %v1155 = vunpack.c.l.b16 %v322
        %v1156 = vunpack.c.h.b16 %v322
        %v1157 = vunpack.c.l.b16 %v323
        %v1158 = vunpack.c.h.b16 %v323
        %v1159 = vunpack.c.l.b16 %v324
        %v1160 = vunpack.c.h.b16 %v324
        %v1161 = vunpack.c.l.b16 %v325
        %v1162 = vunpack.c.h.b16 %v325
        %v1163 = vunpack.c.l.b16 %v326
        %v1164 = vunpack.c.h.b16 %v326
        %v1165 = vunpack.c.l.b16 %v327
        %v1166 = vunpack.c.h.b16 %v327
        %v1167 = vunpack.c.l.b16 %v328
        %v1168 = vunpack.c.h.b16 %v328
        %v1169 = vunpack.c.l.b16 %v329
        %v1170 = vunpack.c.h.b16 %v329
        %v1171 = vunpack.c.l.b16 %v330
        %v1172 = vunpack.c.h.b16 %v330
        %v1173 = vunpack.c.l.b16 %v331
        %v1174 = vunpack.c.h.b16 %v331
        %v1175 = vunpack.c.l.b16 %v332
        %v1176 = vunpack.c.h.b16 %v332
        %v1177 = vunpack.c.l.b16 %v333
        %v1178 = vunpack.c.h.b16 %v333
        %v1179 = vunpack.c.l.b16 %v334
        %v1180 = vunpack.c.h.b16 %v334
        %v1181 = vunpack.c.l.b16 %v335
        %v1182 = vunpack.c.h.b16 %v335
        %v1183 = vunpack.c.l.b16 %v336
        %v1184 = vunpack.c.h.b16 %v336
        %v1185 = vunpack.c.l.b16 %v337
        %v1186 = vunpack.c.h.b16 %v337
        %v1187 = vunpack.c.l.b16 %v338
        %v1188 = vunpack.c.h.b16 %v338
        %v1189 = vunpack.c.l.b16 %v339
        %v1190 = vunpack.c.h.b16 %v339
        %v1191 = vunpack.c.l.b16 %v340
        %v1192 = vunpack.c.h.b16 %v340
        %v1193 = vunpack.c.l.b16 %v341
        %v1194 = vunpack.c.h.b16 %v341
        %v1195 = vunpack.c.l.b16 %v342
        %v1196 = vunpack.c.h.b16 %v342
        %v1197 = vunpack.c.l.b16 %v343
        %v1198 = vunpack.c.h.b16 %v343
        %v1199 = vunpack.c.l.b16 %v344
        %v1200 = vunpack.c.h.b16 %v344
        %v1201 = vunpack.c.l.b16 %v345
        %v1202 = vunpack.c.h.b16 %v345
        %v1203 = vunpack.c.l.b16 %v346
        %v1204 = vunpack.c.h.b16 %v346
        %v1205 = vunpack.c.l.b16 %v347
        %v1206 = vunpack.c.h.b16 %v347
        %v1207 = vunpack.c.l.b16 %v348
        %v1208 = vunpack.c.h.b16 %v348
        %v1209 = vunpack.c.l.b16 %v349
        %v1210 = vunpack.c.h.b16 %v349
        %v1211 = vunpack.c.l.b16 %v350
        %v1212 = vunpack.c.h.b16 %v350
        %v1213 = vunpack.c.l.b16 %v351
        %v1214 = vunpack.c.h.b16 %v351
        %v1215 = vunpack.c.l.b16 %v352
        %v1216 = vunpack.c.h.b16 %v352
        %v1217 = vunpack.c.l.b16 %v353
        %v1218 = vunpack.c.h.b16 %v353
        %v1219 = vunpack.c.l.b16 %v354
        %v1220 = vunpack.c.h.b16 %v354
        %v1221 = vunpack.c.l.b16 %v355
        %v1222 = vunpack.c.h.b16 %v355
        %v1223 = vunpack.c.l.b16 %v356
        %v1224 = vunpack.c.h.b16 %v356
        %v1225 = vunpack.c.l.b16 %v357
        %v1226 = vunpack.c.h.b16 %v357
        %v1227 = vunpack.c.l.b16 %v358
        %v1228 = vunpack.c.h.b16 %v358
        %v1229 = vunpack.c.l.b16 %v359
        %v1230 = vunpack.c.h.b16 %v359
        %v1231 = vunpack.c.l.b16 %v360
        %v1232 = vunpack.c.h.b16 %v360
        %v1233 = vunpack.c.l.b16 %v361
        %v1234 = vunpack.c.h.b16 %v361
        %v1235 = vunpack.c.l.b16 %v362
        %v1236 = vunpack.c.h.b16 %v362
        %v1237 = vunpack.c.l.b16 %v363
        %v1238 = vunpack.c.h.b16 %v363
        %v1239 = vunpack.c.l.b16 %v364
        %v1240 = vunpack.c.h.b16 %v364
        %v1241 = vunpack.c.l.b16 %v365
        %v1242 = vunpack.c.h.b16 %v365
        %v1243 = vunpack.c.l.b16 %v366
        %v1244 = vunpack.c.h.b16 %v366
        %v1245 = vunpack.c.l.b16 %v367
        %v1246 = vunpack.c.h.b16 %v367
        %v1247 = vunpack.c.l.b16 %v368
        %v1248 = vunpack.c.h.b16 %v368
        %v1249 = vunpack.c.l.b16 %v369
        %v1250 = vunpack.c.h.b16 %v369
        %v1251 = vunpack.c.l.b16 %v370
        %v1252 = vunpack.c.h.b16 %v370
        %v1253 = vunpack.c.l.b16 %v371
        %v1254 = vunpack.c.h.b16 %v371
        %v1255 = vunpack.c.l.b16 %v372
        %v1256 = vunpack.c.h.b16 %v372
        %v1257 = vunpack.c.l.b16 %v373
        %v1258 = vunpack.c.h.b16 %v373
        %v1259 = vunpack.c.l.b16 %v374
        %v1260 = vunpack.c.h.b16 %v374
        %v1261 = vunpack.c.l.b16 %v375
        %v1262 = vunpack.c.h.b16 %v375
        %v1263 = vunpack.c.l.b16 %v376
        %v1264 = vunpack.c.h.b16 %v376
        %v1265 = vunpack.c.l.b16 %v377
        %v1266 = vunpack.c.h.b16 %v377
        %v1267 = vunpack.c.l.b16 %v378
        %v1268 = vunpack.c.h.b16 %v378
        %v1269 = vunpack.c.l.b16 %v379
        %v1270 = vunpack.c.h.b16 %v379
        %v1271 = vunpack.c.l.b16 %v380
        %v1272 = vunpack.c.h.b16 %v380
        %v1273 = vunpack.c.l.b16 %v381
        %v1274 = vunpack.c.h.b16 %v381
        %v1275 = vunpack.c.l.b16 %v382
        %v1276 = vunpack.c.h.b16 %v382
        %v1277 = vunpack.c.l.b16 %v383
        %v1278 = vunpack.c.h.b16 %v383
        %v1279 = vunpack.c.l.b16 %v384
        %v1280 = vunpack.c.h.b16 %v384
        %v1281 = vunpack.c.l.b16 %v385
        %v1282 = vunpack.c.h.b16 %v385
        %v1283 = vunpack.c.l.b16 %v386
        %v1284 = vunpack.c.h.b16 %v386
        %v1285 = vunpack.c.l.b16 %v387
        %v1286 = vunpack.c.h.b16 %v387
        %v1287 = vunpack.c.l.b16 %v388
        %v1288 = vunpack.c.h.b16 %v388
        %v1289 = vunpack.c.l.b16 %v389
        %v1290 = vunpack.c.h.b16 %v389
        %v1291 = vunpack.c.l.b16 %v390
        %v1292 = vunpack.c.h.b16 %v390
        %v1293 = vunpack.c.l.b16 %v391
        %v1294 = vunpack.c.h.b16 %v391
        %v1295 = vunpack.c.l.b16 %v392
        %v1296 = vunpack.c.h.b16 %v392
        %v1297 = vunpack.c.l.b16 %v393
        %v1298 = vunpack.c.h.b16 %v393
        %v1299 = vunpack.c.l.b16 %v394
        %v1300 = vunpack.c.h.b16 %v394
        %v1301 = vunpack.c.l.b16 %v395
        %v1302 = vunpack.c.h.b16 %v395
        %v1303 = vunpack.c.l.b16 %v396
        %v1304 = vunpack.c.h.b16 %v396
        %v1305 = vunpack.c.l.b16 %v397
        %v1306 = vunpack.c.h.b16 %v397
        %v1307 = vunpack.c.l.b16 %v398
        %v1308 = vunpack.c.h.b16 %v398
        %v1309 = vunpack.c.l.b16 %v399
        %v1310 = vunpack.c.h.b16 %v399
        %v1311 = vunpack.c.l.b16 %v400
        %v1312 = vunpack.c.h.b16 %v400
        %v1313 = vunpack.c.l.b16 %v401
        %v1314 = vunpack.c.h.b16 %v401
        %v1315 = vunpack.c.l.b16 %v402
        %v1316 = vunpack.c.h.b16 %v402
        %v1317 = vunpack.c.l.b16 %v403
        %v1318 = vunpack.c.h.b16 %v403
        %v1319 = vunpack.c.l.b16 %v404
        %v1320 = vunpack.c.h.b16 %v404
        %v1321 = vunpack.c.l.b16 %v405
        %v1322 = vunpack.c.h.b16 %v405
        %v1323 = vunpack.c.l.b16 %v406
        %v1324 = vunpack.c.h.b16 %v406
        %v1325 = vunpack.c.l.b16 %v407
        %v1326 = vunpack.c.h.b16 %v407
        %v1327 = vunpack.c.l.b16 %v408
        %v1328 = vunpack.c.h.b16 %v408
        %v1329 = vunpack.c.l.b16 %v409
        %v1330 = vunpack.c.h.b16 %v409
        %v1331 = vunpack.c.l.b16 %v410
        %v1332 = vunpack.c.h.b16 %v410
        %v1333 = vunpack.c.l.b16 %v411
        %v1334 = vunpack.c.h.b16 %v411
        %v1335 = vunpack.c.l.b16 %v412
        %v1336 = vunpack.c.h.b16 %v412
        %v1337 = vunpack.c.l.b16 %v413
        %v1338 = vunpack.c.h.b16 %v413
        %v1339 = vunpack.c.l.b16 %v414
        %v1340 = vunpack.c.h.b16 %v414
        %v1341 = vunpack.c.l.b16 %v415
        %v1342 = vunpack.c.h.b16 %v415
        %v1343 = vunpack.c.l.b16 %v416
        %v1344 = vunpack.c.h.b16 %v416
        %v1345 = vunpack.c.l.b16 %v417
        %v1346 = vunpack.c.h.b16 %v417
        %v1347 = vunpack.c.l.b16 %v418
        %v1348 = vunpack.c.h.b16 %v418
        %v1349 = vunpack.c.l.b16 %v419
        %v1350 = vunpack.c.h.b16 %v419
        %v1351 = vunpack.c.l.b16 %v420
        %v1352 = vunpack.c.h.b16 %v420
        %v1353 = vunpack.c.l.b16 %v421
        %v1354 = vunpack.c.h.b16 %v421
        %v1355 = vunpack.c.l.b16 %v422
        %v1356 = vunpack.c.h.b16 %v422
        %v1357 = vunpack.c.l.b16 %v423
        %v1358 = vunpack.c.h.b16 %v423
        %v1359 = vunpack.c.l.b16 %v424
        %v1360 = vunpack.c.h.b16 %v424
        %v1361 = vunpack.c.l.b16 %v425
        %v1362 = vunpack.c.h.b16 %v425
        %v1363 = vunpack.c.l.b16 %v426
        %v1364 = vunpack.c.h.b16 %v426
        %v1365 = vunpack.c.l.b16 %v427
        %v1366 = vunpack.c.h.b16 %v427
        %v1367 = vunpack.c.l.b16 %v428
        %v1368 = vunpack.c.h.b16 %v428
        %v1369 = vunpack.c.l.b16 %v429
        %v1370 = vunpack.c.h.b16 %v429
        %v1371 = vunpack.c.l.b16 %v430
        %v1372 = vunpack.c.h.b16 %v430
        %v1373 = vunpack.c.l.b16 %v431
        %v1374 = vunpack.c.h.b16 %v431
        %v1375 = vunpack.c.l.b16 %v432
        %v1376 = vunpack.c.h.b16 %v432
        %v1377 = vunpack.c.l.b16 %v433
        %v1378 = vunpack.c.h.b16 %v433
        %v1379 = vunpack.c.l.b16 %v434
        %v1380 = vunpack.c.h.b16 %v434
        %v1381 = vunpack.c.l.b16 %v435
        %v1382 = vunpack.c.h.b16 %v435
        %v1383 = vunpack.c.l.b16 %v436
        %v1384 = vunpack.c.h.b16 %v436
        %v1385 = vunpack.c.l.b16 %v437
        %v1386 = vunpack.c.h.b16 %v437
        %v1387 = vunpack.c.l.b16 %v438
        %v1388 = vunpack.c.h.b16 %v438
        %v1389 = vunpack.c.l.b16 %v439
        %v1390 = vunpack.c.h.b16 %v439
        %v1391 = vunpack.c.l.b16 %v440
        %v1392 = vunpack.c.h.b16 %v440
        %v1393 = vunpack.c.l.b16 %v441
        %v1394 = vunpack.c.h.b16 %v441
        %v1395 = vunpack.c.l.b16 %v442
        %v1396 = vunpack.c.h.b16 %v442
        %v1397 = vunpack.c.l.b16 %v443
        %v1398 = vunpack.c.h.b16 %v443
        %v1399 = vunpack.c.l.b16 %v444
        %v1400 = vunpack.c.h.b16 %v444
        %v1401 = vunpack.c.l.b16 %v445
        %v1402 = vunpack.c.h.b16 %v445
        %v1403 = vunpack.c.l.b16 %v446
        %v1404 = vunpack.c.h.b16 %v446
        %v1405 = vunpack.c.l.b16 %v447
        %v1406 = vunpack.c.h.b16 %v447
        %v1407 = vunpack.c.l.b16 %v448
        %v1408 = vunpack.c.h.b16 %v448
        %v1409 = vunpack.c.l.b16 %v449
        %v1410 = vunpack.c.h.b16 %v449
        %v1411 = vunpack.c.l.b16 %v450
        %v1412 = vunpack.c.h.b16 %v450
        %v1413 = vunpack.c.l.b16 %v451
        %v1414 = vunpack.c.h.b16 %v451
        %v1415 = vunpack.c.l.b16 %v452
        %v1416 = vunpack.c.h.b16 %v452
        %v1417 = vunpack.c.l.b16 %v453
        %v1418 = vunpack.c.h.b16 %v453
        %v1419 = vunpack.c.l.b16 %v454
        %v1420 = vunpack.c.h.b16 %v454
        %v1421 = vunpack.c.l.b16 %v455
        %v1422 = vunpack.c.h.b16 %v455
        %v1423 = vunpack.c.l.b16 %v456
        %v1424 = vunpack.c.h.b16 %v456
        %v1425 = vunpack.c.l.b16 %v457
        %v1426 = vunpack.c.h.b16 %v457
        %v1427 = vunpack.c.l.b16 %v458
        %v1428 = vunpack.c.h.b16 %v458
        %v1429 = vunpack.c.l.b16 %v459
        %v1430 = vunpack.c.h.b16 %v459
        %v1431 = vunpack.c.l.b16 %v460
        %v1432 = vunpack.c.h.b16 %v460
        %v1433 = vunpack.c.l.b16 %v461
        %v1434 = vunpack.c.h.b16 %v461
        %v1435 = vunpack.c.l.b16 %v462
        %v1436 = vunpack.c.h.b16 %v462
        %v1437 = vunpack.c.l.b16 %v463
        %v1438 = vunpack.c.h.b16 %v463
        %v1439 = vunpack.c.l.b16 %v464
        %v1440 = vunpack.c.h.b16 %v464
        %v1441 = vunpack.c.l.b16 %v465
        %v1442 = vunpack.c.h.b16 %v465
        %v1443 = vunpack.c.l.b16 %v466
        %v1444 = vunpack.c.h.b16 %v466
        %v1445 = vunpack.c.l.b16 %v467
        %v1446 = vunpack.c.h.b16 %v467
        %v1447 = vunpack.c.l.b16 %v468
        %v1448 = vunpack.c.h.b16 %v468
        %v1449 = vunpack.c.l.b16 %v469
        %v1450 = vunpack.c.h.b16 %v469
        %v1451 = vunpack.c.l.b16 %v470
        %v1452 = vunpack.c.h.b16 %v470
        %v1453 = vunpack.c.l.b16 %v471
        %v1454 = vunpack.c.h.b16 %v471
        %v1455 = vunpack.c.l.b16 %v472
        %v1456 = vunpack.c.h.b16 %v472
        %v1457 = vunpack.c.l.b16 %v473
        %v1458 = vunpack.c.h.b16 %v473
        %v1459 = vunpack.c.l.b16 %v474
        %v1460 = vunpack.c.h.b16 %v474
        %v1461 = vunpack.c.l.b16 %v475
        %v1462 = vunpack.c.h.b16 %v475
        %v1463 = vunpack.c.l.b16 %v476
        %v1464 = vunpack.c.h.b16 %v476
        %v1465 = vunpack.c.l.b16 %v477
        %v1466 = vunpack.c.h.b16 %v477
        %v1467 = vunpack.c.l.b16 %v478
        %v1468 = vunpack.c.h.b16 %v478
        %v1469 = vunpack.c.l.b16 %v479
        %v1470 = vunpack.c.h.b16 %v479
        %v1471 = vunpack.c.l.b16 %v480
        %v1472 = vunpack.c.h.b16 %v480
        %v1473 = vunpack.c.l.b16 %v481
        %v1474 = vunpack.c.h.b16 %v481
        %v1475 = vunpack.c.l.b16 %v482
        %v1476 = vunpack.c.h.b16 %v482
        %v1477 = vunpack.c.l.b16 %v483
        %v1478 = vunpack.c.h.b16 %v483
        %v1479 = vunpack.c.l.b16 %v484
        %v1480 = vunpack.c.h.b16 %v484
        %v1481 = vunpack.c.l.b16 %v485
        %v1482 = vunpack.c.h.b16 %v485
        %v1483 = vunpack.c.l.b16 %v486
        %v1484 = vunpack.c.h.b16 %v486
        %v1485 = vunpack.c.l.b16 %v487
        %v1486 = vunpack.c.h.b16 %v487
        %v1487 = vunpack.c.l.b16 %v488
        %v1488 = vunpack.c.h.b16 %v488
        %v1489 = vunpack.c.l.b16 %v489
        %v1490 = vunpack.c.h.b16 %v489
        %v1491 = vunpack.c.l.b16 %v490
        %v1492 = vunpack.c.h.b16 %v490
        %v1493 = vunpack.c.l.b16 %v491
        %v1494 = vunpack.c.h.b16 %v491
        %v1495 = vunpack.c.l.b16 %v492
        %v1496 = vunpack.c.h.b16 %v492
        %v1497 = vunpack.c.l.b16 %v493
        %v1498 = vunpack.c.h.b16 %v493
        %v1499 = vunpack.c.l.b16 %v494
        %v1500 = vunpack.c.h.b16 %v494
        %v1501 = vunpack.c.l.b16 %v495
        %v1502 = vunpack.c.h.b16 %v495
        %v1503 = vunpack.c.l.b16 %v496
        %v1504 = vunpack.c.h.b16 %v496
        %v1505 = vunpack.c.l.b16 %v497
        %v1506 = vunpack.c.h.b16 %v497
        %v1507 = vunpack.c.l.b16 %v498
        %v1508 = vunpack.c.h.b16 %v498
        %v1509 = vunpack.c.l.b16 %v499
        %v1510 = vunpack.c.h.b16 %v499
        %v1511 = vunpack.c.l.b16 %v500
        %v1512 = vunpack.c.h.b16 %v500
        %v1513 = vunpack.c.l.b16 %v501
        %v1514 = vunpack.c.h.b16 %v501
        %v1515 = vunpack.c.l.b16 %v502
        %v1516 = vunpack.c.h.b16 %v502
        %v1517 = vunpack.c.l.b16 %v503
        %v1518 = vunpack.c.h.b16 %v503
        %v1519 = vunpack.c.l.b16 %v504
        %v1520 = vunpack.c.h.b16 %v504
        %v1521 = vunpack.c.l.b16 %v505
        %v1522 = vunpack.c.h.b16 %v505
        %v1523 = vunpack.c.l.b16 %v506
        %v1524 = vunpack.c.h.b16 %v506
        %v1525 = vunpack.c.l.b16 %v507
        %v1526 = vunpack.c.h.b16 %v507
        %v1527 = vunpack.c.l.b16 %v508
        %v1528 = vunpack.c.h.b16 %v508
        %v1529 = vunpack.c.l.b16 %v509
        %v1530 = vunpack.c.h.b16 %v509
        %v1531 = vunpack.c.l.b16 %v510
        %v1532 = vunpack.c.h.b16 %v510
        %v1533 = vunpack.c.l.b16 %v511
        %v1534 = vunpack.c.h.b16 %v511
        %v1535 = vunpack.c.l.b16 %v512
        %v1536 = vunpack.c.h.b16 %v512
        %v1537 = vunpack.c.l.b16 %v513
        %v1538 = vunpack.c.h.b16 %v513
        %v1539 = vunpack.c.l.b16 %v514
        %v1540 = vunpack.c.h.b16 %v514
        %v1541 = vunpack.c.l.b16 %v515
        %v1542 = vunpack.c.h.b16 %v515
        %v1543 = vunpack.c.l.b16 %v516
        %v1544 = vunpack.c.h.b16 %v516
        %v1545 = vunpack.c.l.b16 %v517
        %v1546 = vunpack.c.h.b16 %v517
        %v1547 = vunpack.c.l.b16 %v518
        %v1548 = vunpack.c.h.b16 %v518
        %v1549 = vunpack.c.l.b16 %v519
        %v1550 = vunpack.c.h.b16 %v519
        %v1551 = vunpack.c.l.b16 %v520
        %v1552 = vunpack.c.h.b16 %v520
        %v1553 = vunpack.c.l.b16 %v521
        %v1554 = vunpack.c.h.b16 %v521
        %v1555 = vunpack.c.l.b16 %v522
        %v1556 = vunpack.c.h.b16 %v522
        %v1557 = vunpack.c.l.b16 %v523
        %v1558 = vunpack.c.h.b16 %v523
        %v1559 = vunpack.c.l.b16 %v524
        %v1560 = vunpack.c.h.b16 %v524
        %v1561 = vunpack.c.l.b16 %v525
        %v1562 = vunpack.c.h.b16 %v525
        %v1563 = vunpack.c.l.b16 %v526
        %v1564 = vunpack.c.h.b16 %v526
        %v1565 = vunpack.c.l.b16 %v527
        %v1566 = vunpack.c.h.b16 %v527
        %v1567 = vunpack.c.l.b16 %v528
        %v1568 = vunpack.c.h.b16 %v528
        %v1569 = vunpack.c.l.b16 %v529
        %v1570 = vunpack.c.h.b16 %v529
        %v1571 = vunpack.c.l.b16 %v530
        %v1572 = vunpack.c.h.b16 %v530
        %v1573 = vunpack.c.l.b16 %v531
        %v1574 = vunpack.c.h.b16 %v531
        %v1575 = vunpack.c.l.b16 %v532
        %v1576 = vunpack.c.h.b16 %v532
        %v1577 = vunpack.c.l.b16 %v533
        %v1578 = vunpack.c.h.b16 %v533
        %v1579 = vunpack.c.l.b16 %v534
        %v1580 = vunpack.c.h.b16 %v534
        %v1581 = vunpack.c.l.b16 %v535
        %v1582 = vunpack.c.h.b16 %v535
        %v1583 = vunpack.c.l.b16 %v536
        %v1584 = vunpack.c.h.b16 %v536
        %v1585 = vunpack.c.l.b16 %v537
        %v1586 = vunpack.c.h.b16 %v537
        %v1587 = vunpack.c.l.b16 %v538
        %v1588 = vunpack.c.h.b16 %v538
        %v1589 = vunpack.c.l.b16 %v539
        %v1590 = vunpack.c.h.b16 %v539
        %v1591 = vunpack.c.l.b16 %v540
        %v1592 = vunpack.c.h.b16 %v540
        %v1593 = vunpack.c.l.b16 %v541
        %v1594 = vunpack.c.h.b16 %v541
        %v1595 = vunpack.c.l.b16 %v542
        %v1596 = vunpack.c.h.b16 %v542
        %v1597 = vunpack.c.l.b16 %v543
        %v1598 = vunpack.c.h.b16 %v543
        %v1599 = vunpack.c.l.b16 %v544
        %v1600 = vunpack.c.h.b16 %v544
        %v1601 = vunpack.c.l.b16 %v545
        %v1602 = vunpack.c.h.b16 %v545
        %v1603 = vunpack.c.l.b16 %v546
        %v1604 = vunpack.c.h.b16 %v546
        %v1605 = vunpack.c.l.b16 %v547
        %v1606 = vunpack.c.h.b16 %v547
        %v1607 = vunpack.c.l.b16 %v548
        %v1608 = vunpack.c.h.b16 %v548
        %v1609 = vunpack.c.l.b16 %v549
        %v1610 = vunpack.c.h.b16 %v549
        %v1611 = vunpack.c.l.b16 %v550
        %v1612 = vunpack.c.h.b16 %v550
        %v1613 = vunpack.c.l.b16 %v551
        %v1614 = vunpack.c.h.b16 %v551
        %v1615 = vunpack.c.l.b16 %v552
        %v1616 = vunpack.c.h.b16 %v552
        %v1617 = vunpack.c.l.b16 %v553
        %v1618 = vunpack.c.h.b16 %v553
        %v1619 = vunpack.c.l.b16 %v554
        %v1620 = vunpack.c.h.b16 %v554
        %v1621 = vunpack.c.l.b16 %v555
        %v1622 = vunpack.c.h.b16 %v555
        %v1623 = vunpack.c.l.b16 %v556
        %v1624 = vunpack.c.h.b16 %v556
        %v1625 = vunpack.c.l.b16 %v557
        %v1626 = vunpack.c.h.b16 %v557
        %v1627 = vunpack.c.l.b16 %v558
        %v1628 = vunpack.c.h.b16 %v558
        %v1629 = vunpack.c.l.b16 %v559
        %v1630 = vunpack.c.h.b16 %v559
        %v1631 = vunpack.c.l.b16 %v560
        %v1632 = vunpack.c.h.b16 %v560
        %v1633 = vunpack.c.l.b16 %v561
        %v1634 = vunpack.c.h.b16 %v561
        %v1635 = vunpack.c.l.b16 %v562
        %v1636 = vunpack.c.h.b16 %v562
        %v1637 = vunpack.c.l.b16 %v563
        %v1638 = vunpack.c.h.b16 %v563
        %v1639 = vunpack.c.l.b16 %v564
        %v1640 = vunpack.c.h.b16 %v564
        %v1641 = vunpack.c.l.b16 %v565
        %v1642 = vunpack.c.h.b16 %v565
        %v1643 = vunpack.c.l.b16 %v566
        %v1644 = vunpack.c.h.b16 %v566
        %v1645 = vunpack.c.l.b16 %v567
        %v1646 = vunpack.c.h.b16 %v567
        %v1647 = vunpack.c.l.b16 %v568
        %v1648 = vunpack.c.h.b16 %v568
        %v1649 = vunpack.c.l.b16 %v569
        %v1650 = vunpack.c.h.b16 %v569
        %v1651 = vunpack.c.l.b16 %v570
        %v1652 = vunpack.c.h.b16 %v570
        %v1653 = vunpack.c.l.b16 %v571
        %v1654 = vunpack.c.h.b16 %v571
        %v1655 = vunpack.c.l.b16 %v572
        %v1656 = vunpack.c.h.b16 %v572
        %v1657 = vunpack.c.l.b16 %v573
        %v1658 = vunpack.c.h.b16 %v573
        %v1659 = vunpack.c.l.b16 %v574
        %v1660 = vunpack.c.h.b16 %v574
        %v1661 = vunpack.c.l.b16 %v575
        %v1662 = vunpack.c.h.b16 %v575
        %v1663 = vunpack.c.l.b16 %v576
        %v1664 = vunpack.c.h.b16 %v576
        %v1665 = vunpack.c.l.b16 %v577
        %v1666 = vunpack.c.h.b16 %v577
        %v1667 = vunpack.c.l.b16 %v578
        %v1668 = vunpack.c.h.b16 %v578
        %v1669 = vunpack.c.l.b16 %v579
        %v1670 = vunpack.c.h.b16 %v579
        %v1671 = vunpack.c.l.b16 %v580
        %v1672 = vunpack.c.h.b16 %v580
        %v1673 = vunpack.c.l.b16 %v581
        %v1674 = vunpack.c.h.b16 %v581
        %v1675 = vunpack.c.l.b16 %v582
        %v1676 = vunpack.c.h.b16 %v582
        %v1677 = vunpack.c.l.b16 %v583
        %v1678 = vunpack.c.h.b16 %v583
        %v1679 = vunpack.c.l.b16 %v584
        %v1680 = vunpack.c.h.b16 %v584
        %v1681 = vunpack.c.l.b16 %v585
        %v1682 = vunpack.c.h.b16 %v585
        %v1683 = vunpack.c.l.b16 %v586
        %v1684 = vunpack.c.h.b16 %v586
        %v1685 = vunpack.c.l.b16 %v587
        %v1686 = vunpack.c.h.b16 %v587
        %v1687 = vunpack.c.l.b16 %v588
        %v1688 = vunpack.c.h.b16 %v588
        %v1689 = vunpack.c.l.b16 %v589
        %v1690 = vunpack.c.h.b16 %v589
        %v1691 = vunpack.c.l.b16 %v590
        %v1692 = vunpack.c.h.b16 %v590
        %v1693 = vunpack.c.l.b16 %v591
        %v1694 = vunpack.c.h.b16 %v591
        %v1695 = vunpack.c.l.b16 %v592
        %v1696 = vunpack.c.h.b16 %v592
        %v1697 = vunpack.c.l.b16 %v593
        %v1698 = vunpack.c.h.b16 %v593
        %v1699 = vunpack.c.l.b16 %v594
        %v1700 = vunpack.c.h.b16 %v594
        %v1701 = vunpack.c.l.b16 %v595
        %v1702 = vunpack.c.h.b16 %v595
        %v1703 = vunpack.c.l.b16 %v596
        %v1704 = vunpack.c.h.b16 %v596
        %v1705 = vunpack.c.l.b16 %v597
        %v1706 = vunpack.c.h.b16 %v597
        %v1707 = vunpack.c.l.b16 %v598
        %v1708 = vunpack.c.h.b16 %v598
        %v1709 = vunpack.c.l.b16 %v599
        %v1710 = vunpack.c.h.b16 %v599
        %v1711 = vunpack.c.l.b16 %v600
        %v1712 = vunpack.c.h.b16 %v600
        %v1713 = vunpack.c.l.b16 %v601
        %v1714 = vunpack.c.h.b16 %v601
        %v1715 = vunpack.c.l.b16 %v602
        %v1716 = vunpack.c.h.b16 %v602
        %v1717 = vunpack.c.l.b16 %v603
        %v1718 = vunpack.c.h.b16 %v603
        %v1719 = vunpack.c.l.b16 %v604
        %v1720 = vunpack.c.h.b16 %v604
        %v1721 = vunpack.c.l.b16 %v605
        %v1722 = vunpack.c.h.b16 %v605
        %v1723 = vunpack.c.l.b16 %v606
        %v1724 = vunpack.c.h.b16 %v606
        %v1725 = vunpack.c.l.b16 %v607
        %v1726 = vunpack.c.h.b16 %v607
        %v1727 = vunpack.c.l.b16 %v608
        %v1728 = vunpack.c.h.b16 %v608
        %v1729 = vunpack.c.l.b16 %v609
        %v1730 = vunpack.c.h.b16 %v609
        %v1731 = vunpack.c.l.b16 %v610
        %v1732 = vunpack.c.h.b16 %v610
        %v1733 = vunpack.c.l.b16 %v611
        %v1734 = vunpack.c.h.b16 %v611
        %v1735 = vunpack.c.l.b16 %v612
        %v1736 = vunpack.c.h.b16 %v612
        %v1737 = vunpack.c.l.b16 %v613
        %v1738 = vunpack.c.h.b16 %v613
        %v1739 = vunpack.c.l.b16 %v614
        %v1740 = vunpack.c.h.b16 %v614
        %v1741 = vunpack.c.l.b16 %v615
        %v1742 = vunpack.c.h.b16 %v615
        %v1743 = vunpack.c.l.b16 %v616
        %v1744 = vunpack.c.h.b16 %v616
        %v1745 = vunpack.c.l.b16 %v617
        %v1746 = vunpack.c.h.b16 %v617
        %v1747 = vunpack.c.l.b16 %v618
        %v1748 = vunpack.c.h.b16 %v618
        %v1749 = vunpack.c.l.b16 %v619
        %v1750 = vunpack.c.h.b16 %v619
        %v1751 = vunpack.c.l.b16 %v620
        %v1752 = vunpack.c.h.b16 %v620
        %v1753 = vunpack.c.l.b16 %v621
        %v1754 = vunpack.c.h.b16 %v621
        %v1755 = vunpack.c.l.b16 %v622
        %v1756 = vunpack.c.h.b16 %v622
        %v1757 = vunpack.c.l.b16 %v623
        %v1758 = vunpack.c.h.b16 %v623
        %v1759 = vunpack.c.l.b16 %v624
        %v1760 = vunpack.c.h.b16 %v624
        %v1761 = vunpack.c.l.b16 %v625
        %v1762 = vunpack.c.h.b16 %v625
        %v1763 = vunpack.c.l.b16 %v626
        %v1764 = vunpack.c.h.b16 %v626
        %v1765 = vunpack.c.l.b16 %v627
        %v1766 = vunpack.c.h.b16 %v627
        %v1767 = vunpack.c.l.b16 %v628
        %v1768 = vunpack.c.h.b16 %v628
        %v1769 = vunpack.c.l.b16 %v629
        %v1770 = vunpack.c.h.b16 %v629
        %v1771 = vunpack.c.l.b16 %v630
        %v1772 = vunpack.c.h.b16 %v630
        %v1773 = vunpack.c.l.b16 %v631
        %v1774 = vunpack.c.h.b16 %v631
        %v1775 = vunpack.c.l.b16 %v632
        %v1776 = vunpack.c.h.b16 %v632
        %v1777 = vunpack.c.l.b16 %v633
        %v1778 = vunpack.c.h.b16 %v633
        %v1779 = vunpack.c.l.b16 %v634
        %v1780 = vunpack.c.h.b16 %v634
        %v1781 = vunpack.c.l.b16 %v635
        %v1782 = vunpack.c.h.b16 %v635
        %v1783 = vunpack.c.l.b16 %v636
        %v1784 = vunpack.c.h.b16 %v636
        %v1785 = vunpack.c.l.b16 %v637
        %v1786 = vunpack.c.h.b16 %v637
        %v1787 = vunpack.c.l.b16 %v638
        %v1788 = vunpack.c.h.b16 %v638
        %v1789 = vunpack.c.l.b16 %v639
        %v1790 = vunpack.c.h.b16 %v639
        %v1791 = vunpack.c.l.b16 %v640
        %v1792 = vunpack.c.h.b16 %v640
        %v1793 = vpack.c.b16 %v1037, %v1025
        %v1794 = vpack.c.b16 %v1038, %v1026
        %v1795 = vpack.c.b16 %v1039, %v1027
        %v1796 = vpack.c.b16 %v1040, %v1028
        %v1797 = vpack.c.b16 %v1041, %v1029
        %v1798 = vpack.c.b16 %v1042, %v1030
        %v1799 = vpack.c.b16 %v1043, %v1031
        %v1800 = vpack.c.b16 %v1044, %v1032
        %v1801 = vpack.c.b16 %v1045, %v1033
        %v1802 = vpack.c.b16 %v1046, %v1034
        %v1803 = vpack.c.b16 %v1047, %v1035
        %v1804 = vpack.c.b16 %v1048, %v1036
        %v1805 = vpack.c.b16 %v1061, %v1049
        %v1806 = vpack.c.b16 %v1062, %v1050
        %v1807 = vpack.c.b16 %v1063, %v1051
        %v1808 = vpack.c.b16 %v1064, %v1052
        %v1809 = vpack.c.b16 %v1065, %v1053
        %v1810 = vpack.c.b16 %v1066, %v1054
        %v1811 = vpack.c.b16 %v1067, %v1055
        %v1812 = vpack.c.b16 %v1068, %v1056
        %v1813 = vpack.c.b16 %v1069, %v1057
        %v1814 = vpack.c.b16 %v1070, %v1058
        %v1815 = vpack.c.b16 %v1071, %v1059
        %v1816 = vpack.c.b16 %v1072, %v1060
        %v1817 = vpack.c.b16 %v1085, %v1073
        %v1818 = vpack.c.b16 %v1086, %v1074
        %v1819 = vpack.c.b16 %v1087, %v1075
        %v1820 = vpack.c.b16 %v1088, %v1076
        %v1821 = vpack.c.b16 %v1089, %v1077
        %v1822 = vpack.c.b16 %v1090, %v1078
        %v1823 = vpack.c.b16 %v1091, %v1079
        %v1824 = vpack.c.b16 %v1092, %v1080
        %v1825 = vpack.c.b16 %v1093, %v1081
        %v1826 = vpack.c.b16 %v1094, %v1082
        %v1827 = vpack.c.b16 %v1095, %v1083
        %v1828 = vpack.c.b16 %v1096, %v1084
        %v1829 = vpack.c.b16 %v1109, %v1097
        %v1830 = vpack.c.b16 %v1110, %v1098
        %v1831 = vpack.c.b16 %v1111, %v1099
        %v1832 = vpack.c.b16 %v1112, %v1100
        %v1833 = vpack.c.b16 %v1113, %v1101
        %v1834 = vpack.c.b16 %v1114, %v1102
        %v1835 = vpack.c.b16 %v1115, %v1103
        %v1836 = vpack.c.b16 %v1116, %v1104
        %v1837 = vpack.c.b16 %v1117, %v1105
        %v1838 = vpack.c.b16 %v1118, %v1106
        %v1839 = vpack.c.b16 %v1119, %v1107
        %v1840 = vpack.c.b16 %v1120, %v1108
        %v1841 = vpack.c.b16 %v1133, %v1121
        %v1842 = vpack.c.b16 %v1134, %v1122
        %v1843 = vpack.c.b16 %v1135, %v1123
        %v1844 = vpack.c.b16 %v1136, %v1124
        %v1845 = vpack.c.b16 %v1137, %v1125
        %v1846 = vpack.c.b16 %v1138, %v1126
        %v1847 = vpack.c.b16 %v1139, %v1127
        %v1848 = vpack.c.b16 %v1140, %v1128
        %v1849 = vpack.c.b16 %v1141, %v1129
        %v1850 = vpack.c.b16 %v1142, %v1130
        %v1851 = vpack.c.b16 %v1143, %v1131
        %v1852 = vpack.c.b16 %v1144, %v1132
        %v1853 = vpack.c.b16 %v1157, %v1145
        %v1854 = vpack.c.b16 %v1158, %v1146
        %v1855 = vpack.c.b16 %v1159, %v1147
        %v1856 = vpack.c.b16 %v1160, %v1148
        %v1857 = vpack.c.b16 %v1161, %v1149
        %v1858 = vpack.c.b16 %v1162, %v1150
        %v1859 = vpack.c.b16 %v1163, %v1151
        %v1860 = vpack.c.b16 %v1164, %v1152
        %v1861 = vpack.c.b16 %v1165, %v1153
        %v1862 = vpack.c.b16 %v1166, %v1154
        %v1863 = vpack.c.b16 %v1167, %v1155
        %v1864 = vpack.c.b16 %v1168, %v1156
        %v1865 = vpack.c.b16 %v1181, %v1169
        %v1866 = vpack.c.b16 %v1182, %v1170
        %v1867 = vpack.c.b16 %v1183, %v1171
        %v1868 = vpack.c.b16 %v1184, %v1172
        %v1869 = vpack.c.b16 %v1185, %v1173
        %v1870 = vpack.c.b16 %v1186, %v1174
        %v1871 = vpack.c.b16 %v1187, %v1175
        %v1872 = vpack.c.b16 %v1188, %v1176
        %v1873 = vpack.c.b16 %v1189, %v1177
        %v1874 = vpack.c.b16 %v1190, %v1178
        %v1875 = vpack.c.b16 %v1191, %v1179
        %v1876 = vpack.c.b16 %v1192, %v1180
        %v1877 = vpack.c.b16 %v1205, %v1193
        %v1878 = vpack.c.b16 %v1206, %v1194
        %v1879 = vpack.c.b16 %v1207, %v1195
        %v1880 = vpack.c.b16 %v1208, %v1196
        %v1881 = vpack.c.b16 %v1209, %v1197
        %v1882 = vpack.c.b16 %v1210, %v1198
        %v1883 = vpack.c.b16 %v1211, %v1199
        %v1884 = vpack.c.b16 %v1212, %v1200
        %v1885 = vpack.c.b16 %v1213, %v1201
        %v1886 = vpack.c.b16 %v1214, %v1202
        %v1887 = vpack.c.b16 %v1215, %v1203
        %v1888 = vpack.c.b16 %v1216, %v1204
        %v1889 = vpack.c.b16 %v1229, %v1217
        %v1890 = vpack.c.b16 %v1230, %v1218
        %v1891 = vpack.c.b16 %v1231, %v1219
        %v1892 = vpack.c.b16 %v1232, %v1220
        %v1893 = vpack.c.b16 %v1233, %v1221
        %v1894 = vpack.c.b16 %v1234, %v1222
        %v1895 = vpack.c.b16 %v1235, %v1223
        %v1896 = vpack.c.b16 %v1236, %v1224
        %v1897 = vpack.c.b16 %v1237, %v1225
        %v1898 = vpack.c.b16 %v1238, %v1226
        %v1899 = vpack.c.b16 %v1239, %v1227
        %v1900 = vpack.c.b16 %v1240, %v1228
        %v1901 = vpack.c.b16 %v1253, %v1241
        %v1902 = vpack.c.b16 %v1254, %v1242
        %v1903 = vpack.c.b16 %v1255, %v1243
        %v1904 = vpack.c.b16 %v1256, %v1244
        %v1905 = vpack.c.b16 %v1257, %v1245
        %v1906 = vpack.c.b16 %v1258, %v1246
        %v1907 = vpack.c.b16 %v1259, %v1247
        %v1908 = vpack.c.b16 %v1260, %v1248
        %v1909 = vpack.c.b16 %v1261, %v1249
        %v1910 = vpack.c.b16 %v1262, %v1250
        %v1911 = vpack.c.b16 %v1263, %v1251
        %v1912 = vpack.c.b16 %v1264, %v1252
        %v1913 = vpack.c.b16 %v1277, %v1265
        %v1914 = vpack.c.b16 %v1278, %v1266
        %v1915 = vpack.c.b16 %v1279, %v1267
        %v1916 = vpack.c.b16 %v1280, %v1268
        %v1917 = vpack.c.b16 %v1281, %v1269
        %v1918 = vpack.c.b16 %v1282, %v1270
        %v1919 = vpack.c.b16 %v1283, %v1271
        %v1920 = vpack.c.b16 %v1284, %v1272
        %v1921 = vpack.c.b16 %v1285, %v1273
        %v1922 = vpack.c.b16 %v1286, %v1274
        %v1923 = vpack.c.b16 %v1287, %v1275
        %v1924 = vpack.c.b16 %v1288, %v1276
        %v1925 = vpack.c.b16 %v1301, %v1289
        %v1926 = vpack.c.b16 %v1302, %v1290
        %v1927 = vpack.c.b16 %v1303, %v1291
        %v1928 = vpack.c.b16 %v1304, %v1292
        %v1929 = vpack.c.b16 %v1305, %v1293
        %v1930 = vpack.c.b16 %v1306, %v1294
        %v1931 = vpack.c.b16 %v1307, %v1295
        %v1932 = vpack.c.b16 %v1308, %v1296
        %v1933 = vpack.c.b16 %v1309, %v1297
        %v1934 = vpack.c.b16 %v1310, %v1298
        %v1935 = vpack.c.b16 %v1311, %v1299
        %v1936 = vpack.c.b16 %v1312, %v1300
        %v1937 = vpack.c.b16 %v1325, %v1313
        %v1938 = vpack.c.b16 %v1326, %v1314
        %v1939 = vpack.c.b16 %v1327, %v1315
        %v1940 = vpack.c.b16 %v1328, %v1316
        %v1941 = vpack.c.b16 %v1329, %v1317
        %v1942 = vpack.c.b16 %v1330, %v1318
        %v1943 = vpack.c.b16 %v1331, %v1319
        %v1944 = vpack.c.b16 %v1332, %v1320
        %v1945 = vpack.c.b16 %v1333, %v1321
        %v1946 = vpack.c.b16 %v1334, %v1322
        %v1947 = vpack.c.b16 %v1335, %v1323
        %v1948 = vpack.c.b16 %v1336, %v1324
        %v1949 = vpack.c.b16 %v1349, %v1337
        %v1950 = vpack.c.b16 %v1350, %v1338
        %v1951 = vpack.c.b16 %v1351, %v1339
        %v1952 = vpack.c.b16 %v1352, %v1340
        %v1953 = vpack.c.b16 %v1353, %v1341
        %v1954 = vpack.c.b16 %v1354, %v1342
        %v1955 = vpack.c.b16 %v1355, %v1343
        %v1956 = vpack.c.b16 %v1356, %v1344
        %v1957 = vpack.c.b16 %v1357, %v1345
        %v1958 = vpack.c.b16 %v1358, %v1346
        %v1959 = vpack.c.b16 %v1359, %v1347
        %v1960 = vpack.c.b16 %v1360, %v1348
        %v1961 = vpack.c.b16 %v1373, %v1361
        %v1962 = vpack.c.b16 %v1374, %v1362
        %v1963 = vpack.c.b16 %v1375, %v1363
        %v1964 = vpack.c.b16 %v1376, %v1364
        %v1965 = vpack.c.b16 %v1377, %v1365
        %v1966 = vpack.c.b16 %v1378, %v1366
        %v1967 = vpack.c.b16 %v1379, %v1367
        %v1968 = vpack.c.b16 %v1380, %v1368
        %v1969 = vpack.c.b16 %v1381, %v1369
        %v1970 = vpack.c.b16 %v1382, %v1370
        %v1971 = vpack.c.b16 %v1383, %v1371
        %v1972 = vpack.c.b16 %v1384, %v1372
        %v1973 = vpack.c.b16 %v1397, %v1385
        %v1974 = vpack.c.b16 %v1398, %v1386
        %v1975 = vpack.c.b16 %v1399, %v1387
        %v1976 = vpack.c.b16 %v1400, %v1388
        %v1977 = vpack.c.b16 %v1401, %v1389
        %v1978 = vpack.c.b16 %v1402, %v1390
        %v1979 = vpack.c.b16 %v1403, %v1391
        %v1980 = vpack.c.b16 %v1404, %v1392
        %v1981 = vpack.c.b16 %v1405, %v1393
        %v1982 = vpack.c.b16 %v1406, %v1394
        %v1983 = vpack.c.b16 %v1407, %v1395
        %v1984 = vpack.c.b16 %v1408, %v1396
        %v1985 = vpack.c.b16 %v1421, %v1409
        %v1986 = vpack.c.b16 %v1422, %v1410
        %v1987 = vpack.c.b16 %v1423, %v1411
        %v1988 = vpack.c.b16 %v1424, %v1412
        %v1989 = vpack.c.b16 %v1425, %v1413
        %v1990 = vpack.c.b16 %v1426, %v1414
        %v1991 = vpack.c.b16 %v1427, %v1415
        %v1992 = vpack.c.b16 %v1428, %v1416
        %v1993 = vpack.c.b16 %v1429, %v1417
        %v1994 = vpack.c.b16 %v1430, %v1418
        %v1995 = vpack.c.b16 %v1431, %v1419
        %v1996 = vpack.c.b16 %v1432, %v1420
        %v1997 = vpack.c.b16 %v1445, %v1433
        %v1998 = vpack.c.b16 %v1446, %v1434
        %v1999 = vpack.c.b16 %v1447, %v1435
        %v2000 = vpack.c.b16 %v1448, %v1436
        %v2001 = vpack.c.b16 %v1449, %v1437
        %v2002 = vpack.c.b16 %v1450, %v1438
        %v2003 = vpack.c.b16 %v1451, %v1439
        %v2004 = vpack.c.b16 %v1452, %v1440
        %v2005 = vpack.c.b16 %v1453, %v1441
        %v2006 = vpack.c.b16 %v1454, %v1442
        %v2007 = vpack.c.b16 %v1455, %v1443
        %v2008 = vpack.c.b16 %v1456, %v1444
        %v2009 = vpack.c.b16 %v1469, %v1457
        %v2010 = vpack.c.b16 %v1470, %v1458
        %v2011 = vpack.c.b16 %v1471, %v1459
        %v2012 = vpack.c.b16 %v1472, %v1460
        %v2013 = vpack.c.b16 %v1473, %v1461
        %v2014 = vpack.c.b16 %v1474, %v1462
        %v2015 = vpack.c.b16 %v1475, %v1463
        %v2016 = vpack.c.b16 %v1476, %v1464
        %v2017 = vpack.c.b16 %v1477, %v1465
        %v2018 = vpack.c.b16 %v1478, %v1466
        %v2019 = vpack.c.b16 %v1479, %v1467
        %v2020 = vpack.c.b16 %v1480, %v1468
        %v2021 = vpack.c.b16 %v1493, %v1481
        %v2022 = vpack.c.b16 %v1494, %v1482
        %v2023 = vpack.c.b16 %v1495, %v1483
        %v2024 = vpack.c.b16 %v1496, %v1484
        %v2025 = vpack.c.b16 %v1497, %v1485
        %v2026 = vpack.c.b16 %v1498, %v1486
        %v2027 = vpack.c.b16 %v1499, %v1487
        %v2028 = vpack.c.b16 %v1500, %v1488
        %v2029 = vpack.c.b16 %v1501, %v1489
        %v2030 = vpack.c.b16 %v1502, %v1490
        %v2031 = vpack.c.b16 %v1503, %v1491
        %v2032 = vpack.c.b16 %v1504, %v1492
        %v2033 = vpack.c.b16 %v1517, %v1505
        %v2034 = vpack.c.b16 %v1518, %v1506
        %v2035 = vpack.c.b16 %v1519, %v1507
        %v2036 = vpack.c.b16 %v1520, %v1508
        %v2037 = vpack.c.b16 %v1521, %v1509
        %v2038 = vpack.c.b16 %v1522, %v1510
        %v2039 = vpack.c.b16 %v1523, %v1511
        %v2040 = vpack.c.b16 %v1524, %v1512
        %v2041 = vpack.c.b16 %v1525, %v1513
        %v2042 = vpack.c.b16 %v1526, %v1514
        %v2043 = vpack.c.b16 %v1527, %v1515
        %v2044 = vpack.c.b16 %v1528, %v1516
        %v2045 = vpack.c.b16 %v1541, %v1529
        %v2046 = vpack.c.b16 %v1542, %v1530
        %v2047 = vpack.c.b16 %v1543, %v1531
        %v2048 = vpack.c.b16 %v1544, %v1532
        %v2049 = vpack.c.b16 %v1545, %v1533
        %v2050 = vpack.c.b16 %v1546, %v1534
        %v2051 = vpack.c.b16 %v1547, %v1535
        %v2052 = vpack.c.b16 %v1548, %v1536
        %v2053 = vpack.c.b16 %v1549, %v1537
        %v2054 = vpack.c.b16 %v1550, %v1538
        %v2055 = vpack.c.b16 %v1551, %v1539
        %v2056 = vpack.c.b16 %v1552, %v1540
        %v2057 = vpack.c.b16 %v1565, %v1553
        %v2058 = vpack.c.b16 %v1566, %v1554
        %v2059 = vpack.c.b16 %v1567, %v1555
        %v2060 = vpack.c.b16 %v1568, %v1556
        %v2061 = vpack.c.b16 %v1569, %v1557
        %v2062 = vpack.c.b16 %v1570, %v1558
        %v2063 = vpack.c.b16 %v1571, %v1559
        %v2064 = vpack.c.b16 %v1572, %v1560
        %v2065 = vpack.c.b16 %v1573, %v1561
        %v2066 = vpack.c.b16 %v1574, %v1562
        %v2067 = vpack.c.b16 %v1575, %v1563
        %v2068 = vpack.c.b16 %v1576, %v1564
        %v2069 = vpack.c.b16 %v1589, %v1577
        %v2070 = vpack.c.b16 %v1590, %v1578
        %v2071 = vpack.c.b16 %v1591, %v1579
        %v2072 = vpack.c.b16 %v1592, %v1580
        %v2073 = vpack.c.b16 %v1593, %v1581
        %v2074 = vpack.c.b16 %v1594, %v1582
        %v2075 = vpack.c.b16 %v1595, %v1583
        %v2076 = vpack.c.b16 %v1596, %v1584
        %v2077 = vpack.c.b16 %v1597, %v1585
        %v2078 = vpack.c.b16 %v1598, %v1586
        %v2079 = vpack.c.b16 %v1599, %v1587
        %v2080 = vpack.c.b16 %v1600, %v1588
        %v2081 = vpack.c.b16 %v1613, %v1601
        %v2082 = vpack.c.b16 %v1614, %v1602
        %v2083 = vpack.c.b16 %v1615, %v1603
        %v2084 = vpack.c.b16 %v1616, %v1604
        %v2085 = vpack.c.b16 %v1617, %v1605
        %v2086 = vpack.c.b16 %v1618, %v1606
        %v2087 = vpack.c.b16 %v1619, %v1607
        %v2088 = vpack.c.b16 %v1620, %v1608
        %v2089 = vpack.c.b16 %v1621, %v1609
        %v2090 = vpack.c.b16 %v1622, %v1610
        %v2091 = vpack.c.b16 %v1623, %v1611
        %v2092 = vpack.c.b16 %v1624, %v1612
        %v2093 = vpack.c.b16 %v1637, %v1625
        %v2094 = vpack.c.b16 %v1638, %v1626
        %v2095 = vpack.c.b16 %v1639, %v1627
        %v2096 = vpack.c.b16 %v1640, %v1628
        %v2097 = vpack.c.b16 %v1641, %v1629
        %v2098 = vpack.c.b16 %v1642, %v1630
        %v2099 = vpack.c.b16 %v1643, %v1631
        %v2100 = vpack.c.b16 %v1644, %v1632
        %v2101 = vpack.c.b16 %v1645, %v1633
        %v2102 = vpack.c.b16 %v1646, %v1634
        %v2103 = vpack.c.b16 %v1647, %v1635
        %v2104 = vpack.c.b16 %v1648, %v1636
        %v2105 = vpack.c.b16 %v1661, %v1649
        %v2106 = vpack.c.b16 %v1662, %v1650
        %v2107 = vpack.c.b16 %v1663, %v1651
        %v2108 = vpack.c.b16 %v1664, %v1652
        %v2109 = vpack.c.b16 %v1665, %v1653
        %v2110 = vpack.c.b16 %v1666, %v1654
        %v2111 = vpack.c.b16 %v1667, %v1655
        %v2112 = vpack.c.b16 %v1668, %v1656
        %v2113 = vpack.c.b16 %v1669, %v1657
        %v2114 = vpack.c.b16 %v1670, %v1658
        %v2115 = vpack.c.b16 %v1671, %v1659
        %v2116 = vpack.c.b16 %v1672, %v1660
        %v2117 = vpack.c.b16 %v1685, %v1673
        %v2118 = vpack.c.b16 %v1686, %v1674
        %v2119 = vpack.c.b16 %v1687, %v1675
        %v2120 = vpack.c.b16 %v1688, %v1676
        %v2121 = vpack.c.b16 %v1689, %v1677
        %v2122 = vpack.c.b16 %v1690, %v1678
        %v2123 = vpack.c.b16 %v1691, %v1679
        %v2124 = vpack.c.b16 %v1692, %v1680
        %v2125 = vpack.c.b16 %v1693, %v1681
        %v2126 = vpack.c.b16 %v1694, %v1682
        %v2127 = vpack.c.b16 %v1695, %v1683
        %v2128 = vpack.c.b16 %v1696, %v1684
        %v2129 = vpack.c.b16 %v1709, %v1697
        %v2130 = vpack.c.b16 %v1710, %v1698
        %v2131 = vpack.c.b16 %v1711, %v1699
        %v2132 = vpack.c.b16 %v1712, %v1700
        %v2133 = vpack.c.b16 %v1713, %v1701
        %v2134 = vpack.c.b16 %v1714, %v1702
        %v2135 = vpack.c.b16 %v1715, %v1703
        %v2136 = vpack.c.b16 %v1716, %v1704
        %v2137 = vpack.c.b16 %v1717, %v1705
        %v2138 = vpack.c.b16 %v1718, %v1706
        %v2139 = vpack.c.b16 %v1719, %v1707
        %v2140 = vpack.c.b16 %v1720, %v1708
        %v2141 = vpack.c.b16 %v1733, %v1721
        %v2142 = vpack.c.b16 %v1734, %v1722
        %v2143 = vpack.c.b16 %v1735, %v1723
        %v2144 = vpack.c.b16 %v1736, %v1724
        %v2145 = vpack.c.b16 %v1737, %v1725
        %v2146 = vpack.c.b16 %v1738, %v1726
        %v2147 = vpack.c.b16 %v1739, %v1727
        %v2148 = vpack.c.b16 %v1740, %v1728
        %v2149 = vpack.c.b16 %v1741, %v1729
        %v2150 = vpack.c.b16 %v1742, %v1730
        %v2151 = vpack.c.b16 %v1743, %v1731
        %v2152 = vpack.c.b16 %v1744, %v1732
        %v2153 = vpack.c.b16 %v1757, %v1745
        %v2154 = vpack.c.b16 %v1758, %v1746
        %v2155 = vpack.c.b16 %v1759, %v1747
        %v2156 = vpack.c.b16 %v1760, %v1748
        %v2157 = vpack.c.b16 %v1761, %v1749
        %v2158 = vpack.c.b16 %v1762, %v1750
        %v2159 = vpack.c.b16 %v1763, %v1751
        %v2160 = vpack.c.b16 %v1764, %v1752
        %v2161 = vpack.c.b16 %v1765, %v1753
        %v2162 = vpack.c.b16 %v1766, %v1754
        %v2163 = vpack.c.b16 %v1767, %v1755
        %v2164 = vpack.c.b16 %v1768, %v1756
        %v2165 = vpack.c.b16 %v1781, %v1769
        %v2166 = vpack.c.b16 %v1782, %v1770
        %v2167 = vpack.c.b16 %v1783, %v1771
        %v2168 = vpack.c.b16 %v1784, %v1772
        %v2169 = vpack.c.b16 %v1785, %v1773
        %v2170 = vpack.c.b16 %v1786, %v1774
        %v2171 = vpack.c.b16 %v1787, %v1775
        %v2172 = vpack.c.b16 %v1788, %v1776
        %v2173 = vpack.c.b16 %v1789, %v1777
        %v2174 = vpack.c.b16 %v1790, %v1778
        %v2175 = vpack.c.b16 %v1791, %v1779
        %v2176 = vpack.c.b16 %v1792, %v1780
        %2561 = vmatprep.subr.bf16.mxu0 %v1878
        %2562 = vmatpush1.bf16.msra.mxu0 %v1877
        %2563 = vmatprep.subr.bf16.mxu0 %v1866
        %2564 = vmatpush1.bf16.msra.mxu0 %v1865
        %2565 = vmatprep.subr.bf16.mxu0 %v1854
        %2566 = vmatpush1.bf16.msra.mxu0 %v1853
        %2567 = vmatprep.subr.bf16.mxu0 %v1842
        %2568 = vmatpush1.bf16.msra.mxu0 %v1841
        %2569 = vmatprep.subr.bf16.mxu0 %v1830
        %2570 = vmatpush1.bf16.msra.mxu0 %v1829
        %2571 = vmatprep.subr.bf16.mxu0 %v1818
        %2572 = vmatpush1.bf16.msra.mxu0 %v1817
        %2573 = vmatprep.subr.bf16.mxu0 %v1806
        %2574 = vmatpush1.bf16.msra.mxu0 %v1805
        %2575 = vmatprep.subr.bf16.mxu0 %v1794
        %2576 = vmatpush1.bf16.msra.mxu0 %v1793
        %2577 = vmatprep.subr.bf16.mxu0 %v1974
        %2578 = vmatpush2.bf16.msra.mxu0 %v1973
        %2579 = vmatprep.subr.bf16.mxu0 %v1962
        %2580 = vmatpush2.bf16.msra.mxu0 %v1961
        %2581 = vmatprep.subr.bf16.mxu0 %v1950
        %2582 = vmatpush2.bf16.msra.mxu0 %v1949
        %2583 = vmatprep.subr.bf16.mxu0 %v1938
        %2584 = vmatpush2.bf16.msra.mxu0 %v1937
        %2585 = vmatprep.subr.bf16.mxu0 %v1926
        %2586 = vmatpush2.bf16.msra.mxu0 %v1925
        %2587 = vmatprep.subr.bf16.mxu0 %v1914
        %2588 = vmatpush2.bf16.msra.mxu0 %v1913
        %2589 = vmatprep.subr.bf16.mxu0 %v1902
        %2590 = vmatpush2.bf16.msra.mxu0 %v1901
        %2591 = vmatprep.subr.bf16.mxu0 %v1890
        %2592 = vmatpush2.bf16.msra.mxu0 %v1889
        %2593 = vmatprep.mubr.bf16.mxu0 %v254
        %2594 = vmatmul.mubr.bf16.gmra.mxu0 %v253
        %v2595 = vpop.f32.mrf.mxu0
        %v2596 = vadd.f32 0.0, %v2595
        %v2597 = vpop.f32.mrf.mxu0
        %v2598 = vadd.f32 0.0, %v2597
        %v2599 = vpop.f32.mrf.mxu0
        %v2600 = vadd.f32 0.0, %v2599
        %v2601 = vpop.f32.mrf.mxu0
        %v2602 = vadd.f32 0.0, %v2601
        %2603 = vdwg.mxu0
        %2604 = vmatprep.subr.bf16.mxu0 %v2070
        %2605 = vmatpush1.bf16.msra.mxu0 %v2069
        %2606 = vmatprep.subr.bf16.mxu0 %v2058
        %2607 = vmatpush1.bf16.msra.mxu0 %v2057
        %2608 = vmatprep.subr.bf16.mxu0 %v2046
        %2609 = vmatpush1.bf16.msra.mxu0 %v2045
        %2610 = vmatprep.subr.bf16.mxu0 %v2034
        %2611 = vmatpush1.bf16.msra.mxu0 %v2033
        %2612 = vmatprep.subr.bf16.mxu0 %v2022
        %2613 = vmatpush1.bf16.msra.mxu0 %v2021
        %2614 = vmatprep.subr.bf16.mxu0 %v2010
        %2615 = vmatpush1.bf16.msra.mxu0 %v2009
        %2616 = vmatprep.subr.bf16.mxu0 %v1998
        %2617 = vmatpush1.bf16.msra.mxu0 %v1997
        %2618 = vmatprep.subr.bf16.mxu0 %v1986
        %2619 = vmatpush1.bf16.msra.mxu0 %v1985
        %2620 = vmatprep.subr.bf16.mxu0 %v2166
        %2621 = vmatpush2.bf16.msra.mxu0 %v2165
        %2622 = vmatprep.subr.bf16.mxu0 %v2154
        %2623 = vmatpush2.bf16.msra.mxu0 %v2153
        %2624 = vmatprep.subr.bf16.mxu0 %v2142
        %2625 = vmatpush2.bf16.msra.mxu0 %v2141
        %2626 = vmatprep.subr.bf16.mxu0 %v2130
        %2627 = vmatpush2.bf16.msra.mxu0 %v2129
        %2628 = vmatprep.subr.bf16.mxu0 %v2118
        %2629 = vmatpush2.bf16.msra.mxu0 %v2117
        %2630 = vmatprep.subr.bf16.mxu0 %v2106
        %2631 = vmatpush2.bf16.msra.mxu0 %v2105
        %2632 = vmatprep.subr.bf16.mxu0 %v2094
        %2633 = vmatpush2.bf16.msra.mxu0 %v2093
        %2634 = vmatprep.subr.bf16.mxu0 %v2082
        %2635 = vmatpush2.bf16.msra.mxu0 %v2081
        %2636 = vmatprep.mubr.bf16.mxu0 %v256
        %2637 = vmatmul.mubr.bf16.gmra.mxu0 %v255
        %v2638 = vpop.f32.mrf.mxu0
        %v2639 = vadd.f32 %v2596, %v2638
        %v2640 = vpop.f32.mrf.mxu0
        %v2641 = vadd.f32 %v2598, %v2640
        %v2642 = vpop.f32.mrf.mxu0
        %v2643 = vadd.f32 %v2600, %v2642
        %v2644 = vpop.f32.mrf.mxu0
        %v2645 = vadd.f32 %v2602, %v2644
        %2646 = vdwg.mxu0
        %2647 = vmatprep.subr.bf16.mxu0 %v1880
        %2648 = vmatpush1.bf16.msra.mxu0 %v1879
        %2649 = vmatprep.subr.bf16.mxu0 %v1868
        %2650 = vmatpush1.bf16.msra.mxu0 %v1867
        %2651 = vmatprep.subr.bf16.mxu0 %v1856
        %2652 = vmatpush1.bf16.msra.mxu0 %v1855
        %2653 = vmatprep.subr.bf16.mxu0 %v1844
        %2654 = vmatpush1.bf16.msra.mxu0 %v1843
        %2655 = vmatprep.subr.bf16.mxu0 %v1832
        %2656 = vmatpush1.bf16.msra.mxu0 %v1831
        %2657 = vmatprep.subr.bf16.mxu0 %v1820
        %2658 = vmatpush1.bf16.msra.mxu0 %v1819
        %2659 = vmatprep.subr.bf16.mxu0 %v1808
        %2660 = vmatpush1.bf16.msra.mxu0 %v1807
        %2661 = vmatprep.subr.bf16.mxu0 %v1796
        %2662 = vmatpush1.bf16.msra.mxu0 %v1795
        %2663 = vmatprep.subr.bf16.mxu0 %v1976
        %2664 = vmatpush2.bf16.msra.mxu0 %v1975
        %2665 = vmatprep.subr.bf16.mxu0 %v1964
        %2666 = vmatpush2.bf16.msra.mxu0 %v1963
        %2667 = vmatprep.subr.bf16.mxu0 %v1952
        %2668 = vmatpush2.bf16.msra.mxu0 %v1951
        %2669 = vmatprep.subr.bf16.mxu0 %v1940
        %2670 = vmatpush2.bf16.msra.mxu0 %v1939
        %2671 = vmatprep.subr.bf16.mxu0 %v1928
        %2672 = vmatpush2.bf16.msra.mxu0 %v1927
        %2673 = vmatprep.subr.bf16.mxu0 %v1916
        %2674 = vmatpush2.bf16.msra.mxu0 %v1915
        %2675 = vmatprep.subr.bf16.mxu0 %v1904
        %2676 = vmatpush2.bf16.msra.mxu0 %v1903
        %2677 = vmatprep.subr.bf16.mxu0 %v1892
        %2678 = vmatpush2.bf16.msra.mxu0 %v1891
        %2679 = vmatprep.mubr.bf16.mxu0 %v254
        %2680 = vmatmul.mubr.bf16.gmra.mxu0 %v253
        %v2681 = vpop.f32.mrf.mxu0
        %v2682 = vadd.f32 0.0, %v2681
        %v2683 = vpop.f32.mrf.mxu0
        %v2684 = vadd.f32 0.0, %v2683
        %v2685 = vpop.f32.mrf.mxu0
        %v2686 = vadd.f32 0.0, %v2685
        %v2687 = vpop.f32.mrf.mxu0
        %v2688 = vadd.f32 0.0, %v2687
        %2689 = vdwg.mxu0
        %2690 = vmatprep.subr.bf16.mxu0 %v2072
        %2691 = vmatpush1.bf16.msra.mxu0 %v2071
        %2692 = vmatprep.subr.bf16.mxu0 %v2060
        %2693 = vmatpush1.bf16.msra.mxu0 %v2059
        %2694 = vmatprep.subr.bf16.mxu0 %v2048
        %2695 = vmatpush1.bf16.msra.mxu0 %v2047
        %2696 = vmatprep.subr.bf16.mxu0 %v2036
        %2697 = vmatpush1.bf16.msra.mxu0 %v2035
        %2698 = vmatprep.subr.bf16.mxu0 %v2024
        %2699 = vmatpush1.bf16.msra.mxu0 %v2023
        %2700 = vmatprep.subr.bf16.mxu0 %v2012
        %2701 = vmatpush1.bf16.msra.mxu0 %v2011
        %2702 = vmatprep.subr.bf16.mxu0 %v2000
        %2703 = vmatpush1.bf16.msra.mxu0 %v1999
        %2704 = vmatprep.subr.bf16.mxu0 %v1988
        %2705 = vmatpush1.bf16.msra.mxu0 %v1987
        %2706 = vmatprep.subr.bf16.mxu0 %v2168
        %2707 = vmatpush2.bf16.msra.mxu0 %v2167
        %2708 = vmatprep.subr.bf16.mxu0 %v2156
        %2709 = vmatpush2.bf16.msra.mxu0 %v2155
        %2710 = vmatprep.subr.bf16.mxu0 %v2144
        %2711 = vmatpush2.bf16.msra.mxu0 %v2143
        %2712 = vmatprep.subr.bf16.mxu0 %v2132
        %2713 = vmatpush2.bf16.msra.mxu0 %v2131
        %2714 = vmatprep.subr.bf16.mxu0 %v2120
        %2715 = vmatpush2.bf16.msra.mxu0 %v2119
        %2716 = vmatprep.subr.bf16.mxu0 %v2108
        %2717 = vmatpush2.bf16.msra.mxu0 %v2107
        %2718 = vmatprep.subr.bf16.mxu0 %v2096
        %2719 = vmatpush2.bf16.msra.mxu0 %v2095
        %2720 = vmatprep.subr.bf16.mxu0 %v2084
        %2721 = vmatpush2.bf16.msra.mxu0 %v2083
        %2722 = vmatprep.mubr.bf16.mxu0 %v256
        %2723 = vmatmul.mubr.bf16.gmra.mxu0 %v255
        %v2724 = vpop.f32.mrf.mxu0
        %v2725 = vadd.f32 %v2682, %v2724
        %v2726 = vpop.f32.mrf.mxu0
        %v2727 = vadd.f32 %v2684, %v2726
        %v2728 = vpop.f32.mrf.mxu0
        %v2729 = vadd.f32 %v2686, %v2728
        %v2730 = vpop.f32.mrf.mxu0
        %v2731 = vadd.f32 %v2688, %v2730
        %2732 = vdwg.mxu0
        %2733 = vmatprep.subr.bf16.mxu0 %v1882
        %2734 = vmatpush1.bf16.msra.mxu0 %v1881
        %2735 = vmatprep.subr.bf16.mxu0 %v1870
        %2736 = vmatpush1.bf16.msra.mxu0 %v1869
        %2737 = vmatprep.subr.bf16.mxu0 %v1858
        %2738 = vmatpush1.bf16.msra.mxu0 %v1857
        %2739 = vmatprep.subr.bf16.mxu0 %v1846
        %2740 = vmatpush1.bf16.msra.mxu0 %v1845
        %2741 = vmatprep.subr.bf16.mxu0 %v1834
        %2742 = vmatpush1.bf16.msra.mxu0 %v1833
        %2743 = vmatprep.subr.bf16.mxu0 %v1822
        %2744 = vmatpush1.bf16.msra.mxu0 %v1821
        %2745 = vmatprep.subr.bf16.mxu0 %v1810
        %2746 = vmatpush1.bf16.msra.mxu0 %v1809
        %2747 = vmatprep.subr.bf16.mxu0 %v1798
        %2748 = vmatpush1.bf16.msra.mxu0 %v1797
        %2749 = vmatprep.subr.bf16.mxu0 %v1978
        %2750 = vmatpush2.bf16.msra.mxu0 %v1977
        %2751 = vmatprep.subr.bf16.mxu0 %v1966
        %2752 = vmatpush2.bf16.msra.mxu0 %v1965
        %2753 = vmatprep.subr.bf16.mxu0 %v1954
        %2754 = vmatpush2.bf16.msra.mxu0 %v1953
        %2755 = vmatprep.subr.bf16.mxu0 %v1942
        %2756 = vmatpush2.bf16.msra.mxu0 %v1941
        %2757 = vmatprep.subr.bf16.mxu0 %v1930
        %2758 = vmatpush2.bf16.msra.mxu0 %v1929
        %2759 = vmatprep.subr.bf16.mxu0 %v1918
        %2760 = vmatpush2.bf16.msra.mxu0 %v1917
        %2761 = vmatprep.subr.bf16.mxu0 %v1906
        %2762 = vmatpush2.bf16.msra.mxu0 %v1905
        %2763 = vmatprep.subr.bf16.mxu0 %v1894
        %2764 = vmatpush2.bf16.msra.mxu0 %v1893
        %2765 = vmatprep.mubr.bf16.mxu0 %v254
        %2766 = vmatmul.mubr.bf16.gmra.mxu0 %v253
        %v2767 = vpop.f32.mrf.mxu0
        %v2768 = vadd.f32 0.0, %v2767
        %v2769 = vpop.f32.mrf.mxu0
        %v2770 = vadd.f32 0.0, %v2769
        %v2771 = vpop.f32.mrf.mxu0
        %v2772 = vadd.f32 0.0, %v2771
        %v2773 = vpop.f32.mrf.mxu0
        %v2774 = vadd.f32 0.0, %v2773
        %2775 = vdwg.mxu0
        %2776 = vmatprep.subr.bf16.mxu0 %v2074
        %2777 = vmatpush1.bf16.msra.mxu0 %v2073
        %2778 = vmatprep.subr.bf16.mxu0 %v2062
        %2779 = vmatpush1.bf16.msra.mxu0 %v2061
        %2780 = vmatprep.subr.bf16.mxu0 %v2050
        %2781 = vmatpush1.bf16.msra.mxu0 %v2049
        %2782 = vmatprep.subr.bf16.mxu0 %v2038
        %2783 = vmatpush1.bf16.msra.mxu0 %v2037
        %2784 = vmatprep.subr.bf16.mxu0 %v2026
        %2785 = vmatpush1.bf16.msra.mxu0 %v2025
        %2786 = vmatprep.subr.bf16.mxu0 %v2014
        %2787 = vmatpush1.bf16.msra.mxu0 %v2013
        %2788 = vmatprep.subr.bf16.mxu0 %v2002
        %2789 = vmatpush1.bf16.msra.mxu0 %v2001
        %2790 = vmatprep.subr.bf16.mxu0 %v1990
        %2791 = vmatpush1.bf16.msra.mxu0 %v1989
        %2792 = vmatprep.subr.bf16.mxu0 %v2170
        %2793 = vmatpush2.bf16.msra.mxu0 %v2169
        %2794 = vmatprep.subr.bf16.mxu0 %v2158
        %2795 = vmatpush2.bf16.msra.mxu0 %v2157
        %2796 = vmatprep.subr.bf16.mxu0 %v2146
        %2797 = vmatpush2.bf16.msra.mxu0 %v2145
        %2798 = vmatprep.subr.bf16.mxu0 %v2134
        %2799 = vmatpush2.bf16.msra.mxu0 %v2133
        %2800 = vmatprep.subr.bf16.mxu0 %v2122
        %2801 = vmatpush2.bf16.msra.mxu0 %v2121
        %2802 = vmatprep.subr.bf16.mxu0 %v2110
        %2803 = vmatpush2.bf16.msra.mxu0 %v2109
        %2804 = vmatprep.subr.bf16.mxu0 %v2098
        %2805 = vmatpush2.bf16.msra.mxu0 %v2097
        %2806 = vmatprep.subr.bf16.mxu0 %v2086
        %2807 = vmatpush2.bf16.msra.mxu0 %v2085
        %2808 = vmatprep.mubr.bf16.mxu0 %v256
        %2809 = vmatmul.mubr.bf16.gmra.mxu0 %v255
        %v2810 = vpop.f32.mrf.mxu0
        %v2811 = vadd.f32 %v2768, %v2810
        %v2812 = vpop.f32.mrf.mxu0
        %v2813 = vadd.f32 %v2770, %v2812
        %v2814 = vpop.f32.mrf.mxu0
        %v2815 = vadd.f32 %v2772, %v2814
        %v2816 = vpop.f32.mrf.mxu0
        %v2817 = vadd.f32 %v2774, %v2816
        %2818 = vdwg.mxu0
        %2819 = vmatprep.subr.bf16.mxu0 %v1884
        %2820 = vmatpush1.bf16.msra.mxu0 %v1883
        %2821 = vmatprep.subr.bf16.mxu0 %v1872
        %2822 = vmatpush1.bf16.msra.mxu0 %v1871
        %2823 = vmatprep.subr.bf16.mxu0 %v1860
        %2824 = vmatpush1.bf16.msra.mxu0 %v1859
        %2825 = vmatprep.subr.bf16.mxu0 %v1848
        %2826 = vmatpush1.bf16.msra.mxu0 %v1847
        %2827 = vmatprep.subr.bf16.mxu0 %v1836
        %2828 = vmatpush1.bf16.msra.mxu0 %v1835
        %2829 = vmatprep.subr.bf16.mxu0 %v1824
        %2830 = vmatpush1.bf16.msra.mxu0 %v1823
        %2831 = vmatprep.subr.bf16.mxu0 %v1812
        %2832 = vmatpush1.bf16.msra.mxu0 %v1811
        %2833 = vmatprep.subr.bf16.mxu0 %v1800
        %2834 = vmatpush1.bf16.msra.mxu0 %v1799
        %2835 = vmatprep.subr.bf16.mxu0 %v1980
        %2836 = vmatpush2.bf16.msra.mxu0 %v1979
        %2837 = vmatprep.subr.bf16.mxu0 %v1968
        %2838 = vmatpush2.bf16.msra.mxu0 %v1967
        %2839 = vmatprep.subr.bf16.mxu0 %v1956
        %2840 = vmatpush2.bf16.msra.mxu0 %v1955
        %2841 = vmatprep.subr.bf16.mxu0 %v1944
        %2842 = vmatpush2.bf16.msra.mxu0 %v1943
        %2843 = vmatprep.subr.bf16.mxu0 %v1932
        %2844 = vmatpush2.bf16.msra.mxu0 %v1931
        %2845 = vmatprep.subr.bf16.mxu0 %v1920
        %2846 = vmatpush2.bf16.msra.mxu0 %v1919
        %2847 = vmatprep.subr.bf16.mxu0 %v1908
        %2848 = vmatpush2.bf16.msra.mxu0 %v1907
        %2849 = vmatprep.subr.bf16.mxu0 %v1896
        %2850 = vmatpush2.bf16.msra.mxu0 %v1895
        %2851 = vmatprep.mubr.bf16.mxu0 %v254
        %2852 = vmatmul.mubr.bf16.gmra.mxu0 %v253
        %v2853 = vpop.f32.mrf.mxu0
        %v2854 = vadd.f32 0.0, %v2853
        %v2855 = vpop.f32.mrf.mxu0
        %v2856 = vadd.f32 0.0, %v2855
        %v2857 = vpop.f32.mrf.mxu0
        %v2858 = vadd.f32 0.0, %v2857
        %v2859 = vpop.f32.mrf.mxu0
        %v2860 = vadd.f32 0.0, %v2859
        %2861 = vdwg.mxu0
        %2862 = vmatprep.subr.bf16.mxu0 %v2076
        %2863 = vmatpush1.bf16.msra.mxu0 %v2075
        %2864 = vmatprep.subr.bf16.mxu0 %v2064
        %2865 = vmatpush1.bf16.msra.mxu0 %v2063
        %2866 = vmatprep.subr.bf16.mxu0 %v2052
        %2867 = vmatpush1.bf16.msra.mxu0 %v2051
        %2868 = vmatprep.subr.bf16.mxu0 %v2040
        %2869 = vmatpush1.bf16.msra.mxu0 %v2039
        %2870 = vmatprep.subr.bf16.mxu0 %v2028
        %2871 = vmatpush1.bf16.msra.mxu0 %v2027
        %2872 = vmatprep.subr.bf16.mxu0 %v2016
        %2873 = vmatpush1.bf16.msra.mxu0 %v2015
        %2874 = vmatprep.subr.bf16.mxu0 %v2004
        %2875 = vmatpush1.bf16.msra.mxu0 %v2003
        %2876 = vmatprep.subr.bf16.mxu0 %v1992
        %2877 = vmatpush1.bf16.msra.mxu0 %v1991
        %2878 = vmatprep.subr.bf16.mxu0 %v2172
        %2879 = vmatpush2.bf16.msra.mxu0 %v2171
        %2880 = vmatprep.subr.bf16.mxu0 %v2160
        %2881 = vmatpush2.bf16.msra.mxu0 %v2159
        %2882 = vmatprep.subr.bf16.mxu0 %v2148
        %2883 = vmatpush2.bf16.msra.mxu0 %v2147
        %2884 = vmatprep.subr.bf16.mxu0 %v2136
        %2885 = vmatpush2.bf16.msra.mxu0 %v2135
        %2886 = vmatprep.subr.bf16.mxu0 %v2124
        %2887 = vmatpush2.bf16.msra.mxu0 %v2123
        %2888 = vmatprep.subr.bf16.mxu0 %v2112
        %2889 = vmatpush2.bf16.msra.mxu0 %v2111
        %2890 = vmatprep.subr.bf16.mxu0 %v2100
        %2891 = vmatpush2.bf16.msra.mxu0 %v2099
        %2892 = vmatprep.subr.bf16.mxu0 %v2088
        %2893 = vmatpush2.bf16.msra.mxu0 %v2087
        %2894 = vmatprep.mubr.bf16.mxu0 %v256
        %2895 = vmatmul.mubr.bf16.gmra.mxu0 %v255
        %v2896 = vpop.f32.mrf.mxu0
        %v2897 = vadd.f32 %v2854, %v2896
        %v2898 = vpop.f32.mrf.mxu0
        %v2899 = vadd.f32 %v2856, %v2898
        %v2900 = vpop.f32.mrf.mxu0
        %v2901 = vadd.f32 %v2858, %v2900
        %v2902 = vpop.f32.mrf.mxu0
        %v2903 = vadd.f32 %v2860, %v2902
        %2904 = vdwg.mxu0
        %2905 = vmatprep.subr.bf16.mxu0 %v1886
        %2906 = vmatpush1.bf16.msra.mxu0 %v1885
        %2907 = vmatprep.subr.bf16.mxu0 %v1874
        %2908 = vmatpush1.bf16.msra.mxu0 %v1873
        %2909 = vmatprep.subr.bf16.mxu0 %v1862
        %2910 = vmatpush1.bf16.msra.mxu0 %v1861
        %2911 = vmatprep.subr.bf16.mxu0 %v1850
        %2912 = vmatpush1.bf16.msra.mxu0 %v1849
        %2913 = vmatprep.subr.bf16.mxu0 %v1838
        %2914 = vmatpush1.bf16.msra.mxu0 %v1837
        %2915 = vmatprep.subr.bf16.mxu0 %v1826
        %2916 = vmatpush1.bf16.msra.mxu0 %v1825
        %2917 = vmatprep.subr.bf16.mxu0 %v1814
        %2918 = vmatpush1.bf16.msra.mxu0 %v1813
        %2919 = vmatprep.subr.bf16.mxu0 %v1802
        %2920 = vmatpush1.bf16.msra.mxu0 %v1801
        %2921 = vmatprep.subr.bf16.mxu0 %v1982
        %2922 = vmatpush2.bf16.msra.mxu0 %v1981
        %2923 = vmatprep.subr.bf16.mxu0 %v1970
        %2924 = vmatpush2.bf16.msra.mxu0 %v1969
        %2925 = vmatprep.subr.bf16.mxu0 %v1958
        %2926 = vmatpush2.bf16.msra.mxu0 %v1957
        %2927 = vmatprep.subr.bf16.mxu0 %v1946
        %2928 = vmatpush2.bf16.msra.mxu0 %v1945
        %2929 = vmatprep.subr.bf16.mxu0 %v1934
        %2930 = vmatpush2.bf16.msra.mxu0 %v1933
        %2931 = vmatprep.subr.bf16.mxu0 %v1922
        %2932 = vmatpush2.bf16.msra.mxu0 %v1921
        %2933 = vmatprep.subr.bf16.mxu0 %v1910
        %2934 = vmatpush2.bf16.msra.mxu0 %v1909
        %2935 = vmatprep.subr.bf16.mxu0 %v1898
        %2936 = vmatpush2.bf16.msra.mxu0 %v1897
        %2937 = vmatprep.mubr.bf16.mxu0 %v254
        %2938 = vmatmul.mubr.bf16.gmra.mxu0 %v253
        %v2939 = vpop.f32.mrf.mxu0
        %v2940 = vadd.f32 0.0, %v2939
        %v2941 = vpop.f32.mrf.mxu0
        %v2942 = vadd.f32 0.0, %v2941
        %v2943 = vpop.f32.mrf.mxu0
        %v2944 = vadd.f32 0.0, %v2943
        %v2945 = vpop.f32.mrf.mxu0
        %v2946 = vadd.f32 0.0, %v2945
        %2947 = vdwg.mxu0
        %2948 = vmatprep.subr.bf16.mxu0 %v2078
        %2949 = vmatpush1.bf16.msra.mxu0 %v2077
        %2950 = vmatprep.subr.bf16.mxu0 %v2066
        %2951 = vmatpush1.bf16.msra.mxu0 %v2065
        %2952 = vmatprep.subr.bf16.mxu0 %v2054
        %2953 = vmatpush1.bf16.msra.mxu0 %v2053
        %2954 = vmatprep.subr.bf16.mxu0 %v2042
        %2955 = vmatpush1.bf16.msra.mxu0 %v2041
        %2956 = vmatprep.subr.bf16.mxu0 %v2030
        %2957 = vmatpush1.bf16.msra.mxu0 %v2029
        %2958 = vmatprep.subr.bf16.mxu0 %v2018
        %2959 = vmatpush1.bf16.msra.mxu0 %v2017
        %2960 = vmatprep.subr.bf16.mxu0 %v2006
        %2961 = vmatpush1.bf16.msra.mxu0 %v2005
        %2962 = vmatprep.subr.bf16.mxu0 %v1994
        %2963 = vmatpush1.bf16.msra.mxu0 %v1993
        %2964 = vmatprep.subr.bf16.mxu0 %v2174
        %2965 = vmatpush2.bf16.msra.mxu0 %v2173
        %2966 = vmatprep.subr.bf16.mxu0 %v2162
        %2967 = vmatpush2.bf16.msra.mxu0 %v2161
        %2968 = vmatprep.subr.bf16.mxu0 %v2150
        %2969 = vmatpush2.bf16.msra.mxu0 %v2149
        %2970 = vmatprep.subr.bf16.mxu0 %v2138
        %2971 = vmatpush2.bf16.msra.mxu0 %v2137
        %2972 = vmatprep.subr.bf16.mxu0 %v2126
        %2973 = vmatpush2.bf16.msra.mxu0 %v2125
        %2974 = vmatprep.subr.bf16.mxu0 %v2114
        %2975 = vmatpush2.bf16.msra.mxu0 %v2113
        %2976 = vmatprep.subr.bf16.mxu0 %v2102
        %2977 = vmatpush2.bf16.msra.mxu0 %v2101
        %2978 = vmatprep.subr.bf16.mxu0 %v2090
        %2979 = vmatpush2.bf16.msra.mxu0 %v2089
        %2980 = vmatprep.mubr.bf16.mxu0 %v256
        %2981 = vmatmul.mubr.bf16.gmra.mxu0 %v255
        %v2982 = vpop.f32.mrf.mxu0
        %v2983 = vadd.f32 %v2940, %v2982
        %v2984 = vpop.f32.mrf.mxu0
        %v2985 = vadd.f32 %v2942, %v2984
        %v2986 = vpop.f32.mrf.mxu0
        %v2987 = vadd.f32 %v2944, %v2986
        %v2988 = vpop.f32.mrf.mxu0
        %v2989 = vadd.f32 %v2946, %v2988
        %2990 = vdwg.mxu0
        %2991 = vmatprep.subr.bf16.mxu0 %v1888
        %2992 = vmatpush1.bf16.msra.mxu0 %v1887
        %2993 = vmatprep.subr.bf16.mxu0 %v1876
        %2994 = vmatpush1.bf16.msra.mxu0 %v1875
        %2995 = vmatprep.subr.bf16.mxu0 %v1864
        %2996 = vmatpush1.bf16.msra.mxu0 %v1863
        %2997 = vmatprep.subr.bf16.mxu0 %v1852
        %2998 = vmatpush1.bf16.msra.mxu0 %v1851
        %2999 = vmatprep.subr.bf16.mxu0 %v1840
        %3000 = vmatpush1.bf16.msra.mxu0 %v1839
        %3001 = vmatprep.subr.bf16.mxu0 %v1828
        %3002 = vmatpush1.bf16.msra.mxu0 %v1827
        %3003 = vmatprep.subr.bf16.mxu0 %v1816
        %3004 = vmatpush1.bf16.msra.mxu0 %v1815
        %3005 = vmatprep.subr.bf16.mxu0 %v1804
        %3006 = vmatpush1.bf16.msra.mxu0 %v1803
        %3007 = vmatprep.subr.bf16.mxu0 %v1984
        %3008 = vmatpush2.bf16.msra.mxu0 %v1983
        %3009 = vmatprep.subr.bf16.mxu0 %v1972
        %3010 = vmatpush2.bf16.msra.mxu0 %v1971
        %3011 = vmatprep.subr.bf16.mxu0 %v1960
        %3012 = vmatpush2.bf16.msra.mxu0 %v1959
        %3013 = vmatprep.subr.bf16.mxu0 %v1948
        %3014 = vmatpush2.bf16.msra.mxu0 %v1947
        %3015 = vmatprep.subr.bf16.mxu0 %v1936
        %3016 = vmatpush2.bf16.msra.mxu0 %v1935
        %3017 = vmatprep.subr.bf16.mxu0 %v1924
        %3018 = vmatpush2.bf16.msra.mxu0 %v1923
        %3019 = vmatprep.subr.bf16.mxu0 %v1912
        %3020 = vmatpush2.bf16.msra.mxu0 %v1911
        %3021 = vmatprep.subr.bf16.mxu0 %v1900
        %3022 = vmatpush2.bf16.msra.mxu0 %v1899
        %3023 = vmatprep.mubr.bf16.mxu0 %v254
        %3024 = vmatmul.mubr.bf16.gmra.mxu0 %v253
        %v3025 = vpop.f32.mrf.mxu0
        %v3026 = vadd.f32 0.0, %v3025
        %v3027 = vpop.f32.mrf.mxu0
        %v3028 = vadd.f32 0.0, %v3027
        %v3029 = vpop.f32.mrf.mxu0
        %v3030 = vadd.f32 0.0, %v3029
        %v3031 = vpop.f32.mrf.mxu0
        %v3032 = vadd.f32 0.0, %v3031
        %3033 = vdwg.mxu0
        %3034 = vmatprep.subr.bf16.mxu0 %v2080
        %3035 = vmatpush1.bf16.msra.mxu0 %v2079
        %3036 = vmatprep.subr.bf16.mxu0 %v2068
        %3037 = vmatpush1.bf16.msra.mxu0 %v2067
        %3038 = vmatprep.subr.bf16.mxu0 %v2056
        %3039 = vmatpush1.bf16.msra.mxu0 %v2055
        %3040 = vmatprep.subr.bf16.mxu0 %v2044
        %3041 = vmatpush1.bf16.msra.mxu0 %v2043
        %3042 = vmatprep.subr.bf16.mxu0 %v2032
        %3043 = vmatpush1.bf16.msra.mxu0 %v2031
        %3044 = vmatprep.subr.bf16.mxu0 %v2020
        %3045 = vmatpush1.bf16.msra.mxu0 %v2019
        %3046 = vmatprep.subr.bf16.mxu0 %v2008
        %3047 = vmatpush1.bf16.msra.mxu0 %v2007
        %3048 = vmatprep.subr.bf16.mxu0 %v1996
        %3049 = vmatpush1.bf16.msra.mxu0 %v1995
        %3050 = vmatprep.subr.bf16.mxu0 %v2176
        %3051 = vmatpush2.bf16.msra.mxu0 %v2175
        %3052 = vmatprep.subr.bf16.mxu0 %v2164
        %3053 = vmatpush2.bf16.msra.mxu0 %v2163
        %3054 = vmatprep.subr.bf16.mxu0 %v2152
        %3055 = vmatpush2.bf16.msra.mxu0 %v2151
        %3056 = vmatprep.subr.bf16.mxu0 %v2140
        %3057 = vmatpush2.bf16.msra.mxu0 %v2139
        %3058 = vmatprep.subr.bf16.mxu0 %v2128
        %3059 = vmatpush2.bf16.msra.mxu0 %v2127
        %3060 = vmatprep.subr.bf16.mxu0 %v2116
        %3061 = vmatpush2.bf16.msra.mxu0 %v2115
        %3062 = vmatprep.subr.bf16.mxu0 %v2104
        %3063 = vmatpush2.bf16.msra.mxu0 %v2103
        %3064 = vmatprep.subr.bf16.mxu0 %v2092
        %3065 = vmatpush2.bf16.msra.mxu0 %v2091
        %3066 = vmatprep.mubr.bf16.mxu0 %v256
        %3067 = vmatmul.mubr.bf16.gmra.mxu0 %v255
        %v3068 = vpop.f32.mrf.mxu0
        %v3069 = vadd.f32 %v3026, %v3068
        %v3070 = vpop.f32.mrf.mxu0
        %v3071 = vadd.f32 %v3028, %v3070
        %v3072 = vpop.f32.mrf.mxu0
        %v3073 = vadd.f32 %v3030, %v3072
        %v3074 = vpop.f32.mrf.mxu0
        %v3075 = vadd.f32 %v3032, %v3074
        %3076 = vdwg.mxu0
        %v3077 = vadd.f32 %v221, %v2639
        %v3078 = vadd.f32 %v222, %v2641
        %v3079 = vadd.f32 %v223, %v2725
        %v3080 = vadd.f32 %v224, %v2727
        %v3081 = vadd.f32 %v225, %v2811
        %v3082 = vadd.f32 %v226, %v2813
        %v3083 = vadd.f32 %v227, %v2897
        %v3084 = vadd.f32 %v228, %v2899
        %v3085 = vadd.f32 %v229, %v2983
        %v3086 = vadd.f32 %v230, %v2985
        %v3087 = vadd.f32 %v231, %v3069
        %v3088 = vadd.f32 %v232, %v3071
        %v3089 = vadd.f32 %v233, %v2643
        %v3090 = vadd.f32 %v234, %v2645
        %v3091 = vadd.f32 %v235, %v2729
        %v3092 = vadd.f32 %v236, %v2731
        %v3093 = vadd.f32 %v237, %v2815
        %v3094 = vadd.f32 %v238, %v2817
        %v3095 = vadd.f32 %v239, %v2901
        %v3096 = vadd.f32 %v240, %v2903
        %v3097 = vadd.f32 %v241, %v2987
        %v3098 = vadd.f32 %v242, %v2989
        %v3099 = vadd.f32 %v243, %v3073
        %v3100 = vadd.f32 %v244, %v3075
        %3101 = vst [vmem:[#allocation7] sm:$0xff] %v3077
        %3102 = vst [vmem:[#allocation7 + $0x8] sm:$0xff] %v3078
        %3103 = vst [vmem:[#allocation7 + $0x10] sm:$0xff] %v3079
        %3104 = vst [vmem:[#allocation7 + $0x18] sm:$0xff] %v3080
        %3105 = vst [vmem:[#allocation7 + $0x20] sm:$0xff] %v3081
        %3106 = vst [vmem:[#allocation7 + $0x28] sm:$0xff] %v3082
        %3107 = vst [vmem:[#allocation7 + $0x30] sm:$0xff] %v3083
        %3108 = vst [vmem:[#allocation7 + $0x38] sm:$0xff] %v3084
        %3109 = vst [vmem:[#allocation7 + $0x40] sm:$0xff] %v3085
        %3110 = vst [vmem:[#allocation7 + $0x48] sm:$0xff] %v3086
        %3111 = vst [vmem:[#allocation7 + $0x50] sm:$0xff] %v3087
        %3112 = vst [vmem:[#allocation7 + $0x58] sm:$0xff] %v3088
        %3113 = vst [vmem:[#allocation7 + $0x60] sm:$0xff] %v3089
        %3114 = vst [vmem:[#allocation7 + $0x68] sm:$0xff] %v3090
        %3115 = vst [vmem:[#allocation7 + $0x70] sm:$0xff] %v3091
        %3116 = vst [vmem:[#allocation7 + $0x78] sm:$0xff] %v3092
        %3117 = vst [vmem:[#allocation7 + $0x80] sm:$0xff] %v3093
        %3118 = vst [vmem:[#allocation7 + $0x88] sm:$0xff] %v3094
        %3119 = vst [vmem:[#allocation7 + $0x90] sm:$0xff] %v3095
        %3120 = vst [vmem:[#allocation7 + $0x98] sm:$0xff] %v3096
        %3121 = vst [vmem:[#allocation7 + $0xa0] sm:$0xff] %v3097
        %3122 = vst [vmem:[#allocation7 + $0xa8] sm:$0xff] %v3098
        %3123 = vst [vmem:[#allocation7 + $0xb0] sm:$0xff] %v3099
        %3124 = vst [vmem:[#allocation7 + $0xb8] sm:$0xff] %v3100
        // Predicated region
        $region41: #{tpu_custom_call.1} parent=27 // pred_check
          %p3125 = pneg %p85
        $region42: #{tpu_custom_call.1} parent=27 // pred_check_branch
          %3127 = sbr.rel (%p3125) target = $region44
        $region43: #{tpu_custom_call.1} parent=27 // pred_region
          %s3129 = ssub.s32 3072, 3072
          %3130 = vsyncadd [#allocation4], %s3129
          %s3131 = sshll.u32 [#allocation7], 4
          %s3132 = int_to_ptr.vmem [resolvable:$true] %s3131
          %3137 = dma.vmem_to_hbm [thread:$0]  %s3132, 3072, %s2, [#allocation4], 1536, 1536, 96
        $region44: #{tpu_custom_call.1} parent=27 // pred_fallthru
          _
        // Predicated region
        $region45: #{tpu_custom_call.1} parent=27 // pred_check
          %p3138 = pneg %p85
        $region46: #{tpu_custom_call.1} parent=27 // pred_check_branch
          %3140 = sbr.rel (%p3138) target = $region48
        $region47: #{tpu_custom_call.1} parent=27 // pred_region
          %3141 = dma.done [#allocation4], 3072
        $region48: #{tpu_custom_call.1} parent=27 // pred_fallthru
          _
      $region28: #{tpu_custom_call.1} parent=5 // pred_fallthru
        _
      %p3142 = scmp.le.s32.totalorder 2, %s15
      // Predicated region
      $region49: #{tpu_custom_call.1} parent=5 // pred_check
        %p3143 = pneg %p3142
      $region50: #{tpu_custom_call.1} parent=5 // pred_check_branch
        %3145 = sbr.rel (%p3143) target = $region52
      $region51: #{tpu_custom_call.1} parent=5 // pred_region
        %s3146 = ssub.s32 %s15, 2
      $region52: #{tpu_custom_call.1} parent=5 // pred_fallthru
        _
    $region6: #{tpu_custom_call.1} parent=1 // loop_footer
      %s19 = sadd.s32 1, %s15
    $region7: #{tpu_custom_call.1} parent=1 // loop_footer_branch
      %14 = sbr.rel target = $region3
    $region8: #{tpu_custom_call.1} parent=1 // loop_exit
      _
    %3147 = vsyncpa [#allocation3], 1
    %s3148 = scalar_lea.sflag [#allocation3], 1
    %3149 = vsyncpa %s3148, 1
    %3150 = vsyncpa [#allocation6], 1
    %s3151 = scalar_lea.sflag [#allocation6], 1
    %3152 = vsyncpa %s3151, 1
    %3153 = vsyncpa [#allocation4], 1
    %s3154 = scalar_lea.sflag [#allocation4], 1
    %3155 = vsyncpa %s3154, 1

</llo_original>
